<compile_context>
chip_gen: v7x
topology: tpu7x:2x2x1
jax: 0.10.0
libtpu: 0.0.40
codegen_flags: <defaults>
</compile_context>

<pallas_src>
import jax
import jax.numpy as jnp
from jax.experimental import pallas as pl
from jax.experimental.pallas import tpu as pltpu

STATE_DIM = 24      # environment_dim (20) + robot_dim (4)
ACTION_DIM = 2
H1 = 800
H2 = 600

# Lane-aligned (multiple-of-128) padded widths.
H1_PAD = 896
H2_PAD = 640
OUT_PAD = 128


def _round_up(x, m):
    return (x + m - 1) // m * m


def _pad_to(x, shape):
    pads = [(0, t - s) for s, t in zip(x.shape, shape)]
    return jnp.pad(x, pads)


def actor_kernel(s_ref, w1_ref, b1_ref, w2_ref, b2_ref, w3_ref, b3_ref, o_ref):
    # Layer 1: (TB, 24) bf16 @ (24, 896) bf16 -> f32 acc, +bias, ReLU, -> bf16
    h1 = jnp.dot(s_ref[...], w1_ref[...], preferred_element_type=jnp.float32)
    h1 = jnp.maximum(h1 + b1_ref[...], 0.0).astype(jnp.bfloat16)
    # Layer 2: (TB, 896) @ (896, 640) -> f32 acc, +bias, ReLU, -> bf16
    h2 = jnp.dot(h1, w2_ref[...], preferred_element_type=jnp.float32)
    h2 = jnp.maximum(h2 + b2_ref[...], 0.0).astype(jnp.bfloat16)
    # Layer 3: (TB, 640) @ (640, 128) -> f32 acc, +bias, Tanh (lane-dense out)
    a = jnp.dot(h2, w3_ref[...], preferred_element_type=jnp.float32)
    o_ref[...] = jnp.tanh(a + b3_ref[...]).astype(o_ref.dtype)


def prepare_params(w1, b1, w2, b2, w3, b3):
    """One-time: zero-pad to lane-aligned widths and cast weights to bf16.

    Zero-padded hidden columns stay exactly zero through bias-add + ReLU, so
    numerics of the real (unpadded) outputs are unchanged (up to bf16 weight
    precision)."""
    w1p = _pad_to(w1, (STATE_DIM, H1_PAD)).astype(jnp.bfloat16)
    b1p = _pad_to(b1, (1, H1_PAD)).astype(jnp.float32)
    w2p = _pad_to(w2, (H1_PAD, H2_PAD)).astype(jnp.bfloat16)
    b2p = _pad_to(b2, (1, H2_PAD)).astype(jnp.float32)
    w3p = _pad_to(w3, (H2_PAD, OUT_PAD)).astype(jnp.bfloat16)
    b3p = _pad_to(b3, (1, OUT_PAD)).astype(jnp.float32)
    return w1p, b1p, w2p, b2p, w3p, b3p


def actor_forward(s, prepped, *, block_b=256):
    """s: (B, 24) float.  prepped: output of prepare_params.  Returns (B, 2) f32."""
    w1p, b1p, w2p, b2p, w3p, b3p = prepped
    B = s.shape[0]

    # Batch tile: at least a sublane tile (8 rows), at most block_b rows.
    # block_b=256 fills the v6e/v7x 256-wide MXU M dimension for throughput
    # batches; tiny RL batches collapse to a single 8-row tile.
    tb = min(block_b, _round_up(B, 8))
    Bp = _round_up(B, tb)
    num_tiles = Bp // tb

    # Cast to bf16 and pad once in the wrapper; skip the pad HLO entirely when
    # the batch is already tile-aligned (e.g. a pre-padded rollout buffer).
    s_bf16 = s.astype(jnp.bfloat16)
    s_p = s_bf16 if Bp == B else _pad_to(s_bf16, (Bp, STATE_DIM))

    weight_bytes = (w1p.size + w2p.size + w3p.size) * 2 \
                 + (b1p.size + b2p.size + b3p.size) * 4
    cost = pl.CostEstimate(
        flops=2 * Bp * (STATE_DIM * H1_PAD + H1_PAD * H2_PAD + H2_PAD * OUT_PAD),
        transcendentals=Bp * OUT_PAD,                      # tanh on all padded lanes
        bytes_accessed=weight_bytes + Bp * STATE_DIM * 2   # bf16 state in
                       + Bp * OUT_PAD * 4,                 # f32 output out
    )

    # Weights/biases: constant index_map + single-buffered (fetched once, no
    # wasted second VMEM copy).  State/output tiles keep default double
    # buffering so they pipeline across batch tiles.
    resident = dict(pipeline_mode=pl.Buffered(1))
    in_specs = [
        pl.BlockSpec((tb, STATE_DIM), lambda i: (i, 0)),                 # state tile
        pl.BlockSpec((STATE_DIM, H1_PAD), lambda i: (0, 0), **resident), # w1
        pl.BlockSpec((1, H1_PAD), lambda i: (0, 0), **resident),         # b1
        pl.BlockSpec((H1_PAD, H2_PAD), lambda i: (0, 0), **resident),    # w2
        pl.BlockSpec((1, H2_PAD), lambda i: (0, 0), **resident),         # b2
        pl.BlockSpec((H2_PAD, OUT_PAD), lambda i: (0, 0), **resident),   # w3
        pl.BlockSpec((1, OUT_PAD), lambda i: (0, 0), **resident),        # b3
    ]

    # Megacore split only pays off when each core gets >=2 batch tiles to
    # amortize its own resident weight fetch; otherwise keep a single core.
    dim_sem = ("parallel",) if num_tiles >= 4 else ("arbitrary",)

    # NOTE: for very large B, switch the output to bf16 (or pack the 2 real
    # action lanes) to avoid writing 126 padded f32 lanes per row.
    out_p = pl.pallas_call(
        actor_kernel,
        out_shape=jax.ShapeDtypeStruct((Bp, OUT_PAD), jnp.float32),
        grid=(num_tiles,),
        in_specs=in_specs,
        out_specs=pl.BlockSpec((tb, OUT_PAD), lambda i: (i, 0)),
        compiler_params=pltpu.CompilerParams(
            dimension_semantics=dim_sem,
            vmem_limit_bytes=32 << 20,
        ),
        cost_estimate=cost,
    )(s_p, w1p, b1p, w2p, b2p, w3p, b3p)

    if Bp == B:
        return out_p[:, :ACTION_DIM]
    return out_p[:B, :ACTION_DIM]


def init_params(key):
    """Deterministic init mimicking PyTorch nn.Linear default:
    U(-1/sqrt(fan_in), 1/sqrt(fan_in)) for both weight and bias.
    Weights stored as (in_features, out_features) so the kernel computes
    s @ W + b (transpose of nn.Linear .weight)."""
    def linear(k, fan_in, fan_out):
        kw, kb = jax.random.split(k)
        bound = 1.0 / jnp.sqrt(jnp.float32(fan_in))
        w = jax.random.uniform(kw, (fan_in, fan_out), jnp.float32, -bound, bound)
        b = jax.random.uniform(kb, (1, fan_out), jnp.float32, -bound, bound)
        return w, b

    k1, k2, k3 = jax.random.split(key, 3)
    w1, b1 = linear(k1, STATE_DIM, H1)
    w2, b2 = linear(k2, H1, H2)
    w3, b3 = linear(k3, H2, ACTION_DIM)
    return w1, b1, w2, b2, w3, b3


def actor_ref_f32(s, w1, b1, w2, b2, w3, b3):
    """Pure-JAX f32 reference (original module semantics)."""
    h1 = jnp.maximum(s @ w1 + b1, 0.0)
    h2 = jnp.maximum(h1 @ w2 + b2, 0.0)
    return jnp.tanh(h2 @ w3 + b3)


def actor_ref_bf16(s, prepped):
    """Pure-JAX reference matching the kernel's bf16-weight/activation,
    f32-accumulate numerics (tight check of the Pallas mechanics)."""
    w1p, b1p, w2p, b2p, w3p, b3p = prepped
    sb = s.astype(jnp.bfloat16)
    h1 = jnp.maximum(
        jnp.dot(sb, w1p, preferred_element_type=jnp.float32) + b1p, 0.0)
    h2 = jnp.maximum(
        jnp.dot(h1.astype(jnp.bfloat16), w2p,
                preferred_element_type=jnp.float32) + b2p, 0.0)
    a = jnp.dot(h2.astype(jnp.bfloat16), w3p,
                preferred_element_type=jnp.float32) + b3p
    return jnp.tanh(a)[:, :ACTION_DIM]


if __name__ == "__main__":
    key = jax.random.PRNGKey(0)
    k_params, k_state = jax.random.split(key)

    params = init_params(k_params)
    prepped = jax.tree_util.tree_map(jax.block_until_ready,
                                     prepare_params(*params))

    batch = 2
    s = jax.random.normal(k_state, (batch, STATE_DIM), jnp.float32)

    out = actor_forward(s, prepped)
    out = jax.block_until_ready(out)
    assert out.shape == (batch, ACTION_DIM), out.shape

    # Tight check against a numerics-matched (bf16) reference.
    expected_bf16 = actor_ref_bf16(s, prepped)
    assert jnp.allclose(out, expected_bf16, atol=2e-2, rtol=2e-2), (
        "Pallas kernel output mismatch vs bf16-matched JAX reference")

    # Loose sanity check against the full-f32 original-module reference
    # (difference is purely the bf16 weight/activation cast).
    expected_f32 = actor_ref_f32(s, *params)
    max_diff = float(jnp.max(jnp.abs(out - expected_f32)))
    assert max_diff < 5e-2, f"bf16 drift vs f32 reference too large: {max_diff}"

    print("KERNEL_OK")
</pallas_src>

<mosaic_0001>
module attributes {stable_mosaic.version = 11 : i64} {
  func.func @actor_kernel(%arg0: i32, %arg1: memref<8x24xbf16, #tpu.memory_space<vmem>>, %arg2: memref<24x896xbf16, #tpu.memory_space<vmem>>, %arg3: memref<1x896xf32, #tpu.memory_space<vmem>>, %arg4: memref<896x640xbf16, #tpu.memory_space<vmem>>, %arg5: memref<1x640xf32, #tpu.memory_space<vmem>>, %arg6: memref<640x128xbf16, #tpu.memory_space<vmem>>, %arg7: memref<1x128xf32, #tpu.memory_space<vmem>>, %arg8: memref<8x128xf32, #tpu.memory_space<vmem>>) attributes {dimension_semantics = [#tpu.dimension_semantics<arbitrary>], iteration_bounds = array<i64: 1>, scalar_prefetch = 0 : i64, scratch_operands = 0 : i64, tpu.core_type = #tpu.core_type<tc>, window_params = [{transform_indices = @transform_0, window_bounds = array<i64: 8, 24>}, {pipeline_mode = #tpu.pipeline_mode<synchronous>, transform_indices = @transform_1, window_bounds = array<i64: 24, 896>}, {pipeline_mode = #tpu.pipeline_mode<synchronous>, transform_indices = @transform_2, window_bounds = array<i64: 1, 896>}, {pipeline_mode = #tpu.pipeline_mode<synchronous>, transform_indices = @transform_3, window_bounds = array<i64: 896, 640>}, {pipeline_mode = #tpu.pipeline_mode<synchronous>, transform_indices = @transform_4, window_bounds = array<i64: 1, 640>}, {pipeline_mode = #tpu.pipeline_mode<synchronous>, transform_indices = @transform_5, window_bounds = array<i64: 640, 128>}, {pipeline_mode = #tpu.pipeline_mode<synchronous>, transform_indices = @transform_6, window_bounds = array<i64: 1, 128>}, {transform_indices = @transform_7, window_bounds = array<i64: 8, 128>}]} {
    %c0 = arith.constant 0 : index
    %c0_0 = arith.constant 0 : index
    %0 = vector.load %arg1[%c0, %c0_0] : memref<8x24xbf16, #tpu.memory_space<vmem>>, vector<8x24xbf16>
    %c0_1 = arith.constant 0 : index
    %c0_2 = arith.constant 0 : index
    %1 = vector.load %arg2[%c0_1, %c0_2] : memref<24x896xbf16, #tpu.memory_space<vmem>>, vector<24x896xbf16>
    %cst = arith.constant dense<0.000000e+00> : vector<8x896xf32>
    %2 = tpu.matmul %0, %1, %cst {dimension_numbers = #tpu.dot_dimension_numbers<[1], [0], [0], [1], [0, 0, 1, 1], [], []>} : vector<8x24xbf16>, vector<24x896xbf16>, vector<8x896xf32> -> vector<8x896xf32>
    %c0_3 = arith.constant 0 : index
    %c0_4 = arith.constant 0 : index
    %3 = vector.load %arg3[%c0_3, %c0_4] : memref<1x896xf32, #tpu.memory_space<vmem>>, vector<1x896xf32>
    %4 = vector.broadcast %3 : vector<1x896xf32> to vector<8x896xf32>
    %5 = arith.addf %2, %4 : vector<8x896xf32>
    %cst_5 = arith.constant 0.000000e+00 : f32
    %6 = vector.broadcast %cst_5 : f32 to vector<8x896xf32>
    %7 = arith.maximumf %5, %6 : vector<8x896xf32>
    %8 = arith.truncf %7 : vector<8x896xf32> to vector<8x896xbf16>
    %c0_6 = arith.constant 0 : index
    %c0_7 = arith.constant 0 : index
    %9 = vector.load %arg4[%c0_6, %c0_7] : memref<896x640xbf16, #tpu.memory_space<vmem>>, vector<896x640xbf16>
    %cst_8 = arith.constant dense<0.000000e+00> : vector<8x640xf32>
    %10 = tpu.matmul %8, %9, %cst_8 {dimension_numbers = #tpu.dot_dimension_numbers<[1], [0], [0], [1], [0, 0, 1, 1], [], []>} : vector<8x896xbf16>, vector<896x640xbf16>, vector<8x640xf32> -> vector<8x640xf32>
    %c0_9 = arith.constant 0 : index
    %c0_10 = arith.constant 0 : index
    %11 = vector.load %arg5[%c0_9, %c0_10] : memref<1x640xf32, #tpu.memory_space<vmem>>, vector<1x640xf32>
    %12 = vector.broadcast %11 : vector<1x640xf32> to vector<8x640xf32>
    %13 = arith.addf %10, %12 : vector<8x640xf32>
    %cst_11 = arith.constant 0.000000e+00 : f32
    %14 = vector.broadcast %cst_11 : f32 to vector<8x640xf32>
    %15 = arith.maximumf %13, %14 : vector<8x640xf32>
    %16 = arith.truncf %15 : vector<8x640xf32> to vector<8x640xbf16>
    %c0_12 = arith.constant 0 : index
    %c0_13 = arith.constant 0 : index
    %17 = vector.load %arg6[%c0_12, %c0_13] : memref<640x128xbf16, #tpu.memory_space<vmem>>, vector<640x128xbf16>
    %cst_14 = arith.constant dense<0.000000e+00> : vector<8x128xf32>
    %18 = tpu.matmul %16, %17, %cst_14 {dimension_numbers = #tpu.dot_dimension_numbers<[1], [0], [0], [1], [0, 0, 1, 1], [], []>} : vector<8x640xbf16>, vector<640x128xbf16>, vector<8x128xf32> -> vector<8x128xf32>
    %c0_15 = arith.constant 0 : index
    %c0_16 = arith.constant 0 : index
    %19 = vector.load %arg7[%c0_15, %c0_16] : memref<1x128xf32, #tpu.memory_space<vmem>>, vector<1x128xf32>
    %20 = vector.broadcast %19 : vector<1x128xf32> to vector<8x128xf32>
    %21 = arith.addf %18, %20 : vector<8x128xf32>
    %22 = math.tanh %21 : vector<8x128xf32>
    %c0_17 = arith.constant 0 : index
    %c0_18 = arith.constant 0 : index
    %23 = vector.load %arg8[%c0_17, %c0_18] : memref<8x128xf32, #tpu.memory_space<vmem>>, vector<8x128xf32>
    tpu.vector_store %arg8[%c0_17, %c0_18], %22 {strides = array<i32>} : memref<8x128xf32, #tpu.memory_space<vmem>>, vector<8x128xf32>,
    return
  }
  func.func @transform_0(%arg0: i32) -> (i32, i32) {
    %c0_i32 = arith.constant 0 : i32
    %c0_i32_0 = arith.constant 0 : i32
    return %arg0, %c0_i32 : i32, i32
  }
  func.func @transform_1(%arg0: i32) -> (i32, i32) {
    %c0_i32 = arith.constant 0 : i32
    %c0_i32_0 = arith.constant 0 : i32
    %c0_i32_1 = arith.constant 0 : i32
    return %c0_i32, %c0_i32_0 : i32, i32
  }
  func.func @transform_2(%arg0: i32) -> (i32, i32) {
    %c0_i32 = arith.constant 0 : i32
    %c0_i32_0 = arith.constant 0 : i32
    %c0_i32_1 = arith.constant 0 : i32
    return %c0_i32, %c0_i32_0 : i32, i32
  }
  func.func @transform_3(%arg0: i32) -> (i32, i32) {
    %c0_i32 = arith.constant 0 : i32
    %c0_i32_0 = arith.constant 0 : i32
    %c0_i32_1 = arith.constant 0 : i32
    return %c0_i32, %c0_i32_0 : i32, i32
  }
  func.func @transform_4(%arg0: i32) -> (i32, i32) {
    %c0_i32 = arith.constant 0 : i32
    %c0_i32_0 = arith.constant 0 : i32
    %c0_i32_1 = arith.constant 0 : i32
    return %c0_i32, %c0_i32_0 : i32, i32
  }
  func.func @transform_5(%arg0: i32) -> (i32, i32) {
    %c0_i32 = arith.constant 0 : i32
    %c0_i32_0 = arith.constant 0 : i32
    %c0_i32_1 = arith.constant 0 : i32
    return %c0_i32, %c0_i32_0 : i32, i32
  }
  func.func @transform_6(%arg0: i32) -> (i32, i32) {
    %c0_i32 = arith.constant 0 : i32
    %c0_i32_0 = arith.constant 0 : i32
    %c0_i32_1 = arith.constant 0 : i32
    return %c0_i32, %c0_i32_0 : i32, i32
  }
  func.func @transform_7(%arg0: i32) -> (i32, i32) {
    %c0_i32 = arith.constant 0 : i32
    %c0_i32_0 = arith.constant 0 : i32
    return %arg0, %c0_i32 : i32, i32
  }
}

</mosaic_0001>

<llo_original>
// kernel: tpu_custom_call.1
$region0: #{tpu_custom_call.1}
  #allocation0 [shape = 'u32[]', space=smem, size = 0x4, offset = 0x4, fixed_abs, tag = 'smem constant byte address 0x4 - core index']
  #allocation1 [shape = 'u32[144,128]{1,0:T(1,128)}', space=vmem, size = 0x12000, scoped, tag = 'internal scratch']
  %s0 = inlined_call_operand.hbm [shape: bf16[8,24], index: 0, kind: input, shape index: {}]
  %s1 = inlined_call_operand.hbm [shape: bf16[24,896], index: 1, kind: input, shape index: {}]
  %s2 = inlined_call_operand.hbm [shape: f32[1,896], index: 2, kind: input, shape index: {}]
  %s3 = inlined_call_operand.hbm [shape: bf16[896,640], index: 3, kind: input, shape index: {}]
  %s4 = inlined_call_operand.hbm [shape: f32[1,640], index: 4, kind: input, shape index: {}]
  %s5 = inlined_call_operand.hbm [shape: bf16[640,128], index: 5, kind: input, shape index: {}]
  %s6 = inlined_call_operand.hbm [shape: f32[1,128], index: 6, kind: input, shape index: {}]
  %s7 = inlined_call_operand.hbm [shape: f32[8,128], index: 7, kind: output, shape index: {}]
  %s8 = sld [smem:[#allocation0]]
  $region66: #{tpu_custom_call.1} parent=0
    _
  %s10 = ssub.s32 1, %s8
  %s11 = scalar_select 0, %s10, %s8
  $region1: #{tpu_custom_call.1} parent=0
    #allocation2 [shape = 'u8[2048]{0}', space=vmem, size = 0x800, scoped, tag = 'input window, operand 0, single buffered']
    #allocation3 [shape = 's32[1]{0}', space=sflag, size = 0x4, scoped, tag = 'scoped memory for tpu_custom_call.1']
    #allocation4 [shape = 's32[1]{0}', space=sflag, size = 0x4, scoped, tag = 'scoped memory for tpu_custom_call.1']
    #allocation5 [shape = 'u8[43008]{0}', space=vmem, size = 0xa800, scoped, tag = 'input window, operand 1, single buffered']
    #allocation6 [shape = 's32[1]{0}', space=sflag, size = 0x4, scoped, tag = 'scoped memory for tpu_custom_call.1']
    #allocation7 [shape = 'u8[3584]{0}', space=vmem, size = 0x1000, scoped, tag = 'input window, operand 2, single buffered']
    #allocation8 [shape = 'u8[1146880]{0}', space=vmem, size = 0x118000, scoped, tag = 'input window, operand 3, single buffered']
    #allocation9 [shape = 's32[1]{0}', space=sflag, size = 0x4, scoped, tag = 'scoped memory for tpu_custom_call.1']
    #allocation10 [shape = 'u8[2560]{0}', space=vmem, size = 0xc00, scoped, tag = 'input window, operand 4, single buffered']
    #allocation11 [shape = 'u8[163840]{0}', space=vmem, size = 0x28000, scoped, tag = 'input window, operand 5, single buffered']
    #allocation12 [shape = 's32[1]{0}', space=sflag, size = 0x4, scoped, tag = 'scoped memory for tpu_custom_call.1']
    #allocation13 [shape = 'u8[512]{0}', space=vmem, size = 0x400, scoped, tag = 'input window, operand 6, single buffered']
    #allocation14 [shape = 'u8[4096]{0}', space=vmem, size = 0x1000, scoped, tag = 'output window, operand 0, single buffered']
    %12 = vsyncpa [#allocation3], 0
    %13 = vsyncpa [#allocation6], 0
    %14 = vsyncpa [#allocation9], 0
    %15 = vsyncpa [#allocation12], 0
    %16 = vsyncpa [#allocation4], 0
    // Predicated region
    $region2: #{tpu_custom_call.1} parent=1 // pred_check
      _
    $region3: #{tpu_custom_call.1} parent=1 // pred_check_branch
      %18 = sbr.rel (0) target = $region5
    $region4: #{tpu_custom_call.1} parent=1 // pred_region
      %s20 = ssub.s32 64, 64
      %21 = vsyncadd [#allocation3], %s20
      %s23 = sshll.u32 [#allocation2], 4
      %s24 = int_to_ptr.vmem [resolvable:$true] %s23
      %26 = dma.hbm_to_vmem [thread:$0]  %s0, 64, %s24, [#allocation3]
    $region5: #{tpu_custom_call.1} parent=1 // pred_fallthru
      _
    // Predicated region
    $region6: #{tpu_custom_call.1} parent=1 // pred_check
      _
    $region7: #{tpu_custom_call.1} parent=1 // pred_check_branch
      %28 = sbr.rel (0) target = $region9
    $region8: #{tpu_custom_call.1} parent=1 // pred_region
      %s30 = ssub.s32 1344, 1344
      %31 = vsyncadd [#allocation6], %s30
      %s32 = sshll.u32 [#allocation5], 4
      %s33 = int_to_ptr.vmem [resolvable:$true] %s32
      %38 = dma.hbm_to_vmem [thread:$0]  %s1, 1344, %s33, [#allocation6], 448, 448, 28
    $region9: #{tpu_custom_call.1} parent=1 // pred_fallthru
      _
    // Predicated region
    $region10: #{tpu_custom_call.1} parent=1 // pred_check
      _
    $region11: #{tpu_custom_call.1} parent=1 // pred_check_branch
      %40 = sbr.rel (0) target = $region13
    $region12: #{tpu_custom_call.1} parent=1 // pred_region
      %s42 = ssub.s32 112, 112
      %43 = vsyncadd [#allocation6], %s42
      %s45 = sshll.u32 [#allocation7], 4
      %s46 = int_to_ptr.vmem [resolvable:$true] %s45
      %48 = dma.hbm_to_vmem [thread:$0]  %s2, 112, %s46, [#allocation6]
    $region13: #{tpu_custom_call.1} parent=1 // pred_fallthru
      _
    // Predicated region
    $region14: #{tpu_custom_call.1} parent=1 // pred_check
      _
    $region15: #{tpu_custom_call.1} parent=1 // pred_check_branch
      %50 = sbr.rel (0) target = $region17
    $region16: #{tpu_custom_call.1} parent=1 // pred_region
      %s52 = ssub.s32 35840, 35840
      %53 = vsyncadd [#allocation9], %s52
      %s54 = sshll.u32 [#allocation8], 4
      %s55 = int_to_ptr.vmem [resolvable:$true] %s54
      %60 = dma.hbm_to_vmem [thread:$0]  %s3, 35840, %s55, [#allocation9], 320, 320, 20
    $region17: #{tpu_custom_call.1} parent=1 // pred_fallthru
      _
    // Predicated region
    $region18: #{tpu_custom_call.1} parent=1 // pred_check
      _
    $region19: #{tpu_custom_call.1} parent=1 // pred_check_branch
      %62 = sbr.rel (0) target = $region21
    $region20: #{tpu_custom_call.1} parent=1 // pred_region
      %s64 = ssub.s32 80, 80
      %65 = vsyncadd [#allocation9], %s64
      %s67 = sshll.u32 [#allocation10], 4
      %s68 = int_to_ptr.vmem [resolvable:$true] %s67
      %70 = dma.hbm_to_vmem [thread:$0]  %s4, 80, %s68, [#allocation9]
    $region21: #{tpu_custom_call.1} parent=1 // pred_fallthru
      _
    // Predicated region
    $region22: #{tpu_custom_call.1} parent=1 // pred_check
      _
    $region23: #{tpu_custom_call.1} parent=1 // pred_check_branch
      %72 = sbr.rel (0) target = $region25
    $region24: #{tpu_custom_call.1} parent=1 // pred_region
      %s74 = ssub.s32 5120, 5120
      %75 = vsyncadd [#allocation12], %s74
      %s76 = sshll.u32 [#allocation11], 4
      %s77 = int_to_ptr.vmem [resolvable:$true] %s76
      %82 = dma.hbm_to_vmem [thread:$0]  %s5, 5120, %s77, [#allocation12], 64, 64, 4
    $region25: #{tpu_custom_call.1} parent=1 // pred_fallthru
      _
    // Predicated region
    $region26: #{tpu_custom_call.1} parent=1 // pred_check
      _
    $region27: #{tpu_custom_call.1} parent=1 // pred_check_branch
      %84 = sbr.rel (0) target = $region29
    $region28: #{tpu_custom_call.1} parent=1 // pred_region
      %s86 = ssub.s32 16, 16
      %87 = vsyncadd [#allocation12], %s86
      %s89 = sshll.u32 [#allocation13], 4
      %s90 = int_to_ptr.vmem [resolvable:$true] %s89
      %92 = dma.hbm_to_vmem [thread:$0]  %s6, 16, %s90, [#allocation12]
    $region29: #{tpu_custom_call.1} parent=1 // pred_fallthru
      _
    // Predicated region
    $region30: #{tpu_custom_call.1} parent=1 // pred_check
      _
    $region31: #{tpu_custom_call.1} parent=1 // pred_check_branch
      %94 = sbr.rel (0) target = $region33
    $region32: #{tpu_custom_call.1} parent=1 // pred_region
      %95 = dma.done [#allocation3], 64
    $region33: #{tpu_custom_call.1} parent=1 // pred_fallthru
      _
    // Predicated region
    $region34: #{tpu_custom_call.1} parent=1 // pred_check
      _
    $region35: #{tpu_custom_call.1} parent=1 // pred_check_branch
      %97 = sbr.rel (0) target = $region37
    $region36: #{tpu_custom_call.1} parent=1 // pred_region
      %98 = dma.done [#allocation6], 1344
    $region37: #{tpu_custom_call.1} parent=1 // pred_fallthru
      _
    // Predicated region
    $region38: #{tpu_custom_call.1} parent=1 // pred_check
      _
    $region39: #{tpu_custom_call.1} parent=1 // pred_check_branch
      %100 = sbr.rel (0) target = $region41
    $region40: #{tpu_custom_call.1} parent=1 // pred_region
      %101 = dma.done [#allocation6], 112
    $region41: #{tpu_custom_call.1} parent=1 // pred_fallthru
      _
    // Predicated region
    $region42: #{tpu_custom_call.1} parent=1 // pred_check
      _
    $region43: #{tpu_custom_call.1} parent=1 // pred_check_branch
      %103 = sbr.rel (0) target = $region45
    $region44: #{tpu_custom_call.1} parent=1 // pred_region
      %104 = dma.done [#allocation9], 35840
    $region45: #{tpu_custom_call.1} parent=1 // pred_fallthru
      _
    // Predicated region
    $region46: #{tpu_custom_call.1} parent=1 // pred_check
      _
    $region47: #{tpu_custom_call.1} parent=1 // pred_check_branch
      %106 = sbr.rel (0) target = $region49
    $region48: #{tpu_custom_call.1} parent=1 // pred_region
      %107 = dma.done [#allocation9], 80
    $region49: #{tpu_custom_call.1} parent=1 // pred_fallthru
      _
    // Predicated region
    $region50: #{tpu_custom_call.1} parent=1 // pred_check
      _
    $region51: #{tpu_custom_call.1} parent=1 // pred_check_branch
      %109 = sbr.rel (0) target = $region53
    $region52: #{tpu_custom_call.1} parent=1 // pred_region
      %110 = dma.done [#allocation12], 5120
    $region53: #{tpu_custom_call.1} parent=1 // pred_fallthru
      _
    // Predicated region
    $region54: #{tpu_custom_call.1} parent=1 // pred_check
      _
    $region55: #{tpu_custom_call.1} parent=1 // pred_check_branch
      %112 = sbr.rel (0) target = $region57
    $region56: #{tpu_custom_call.1} parent=1 // pred_region
      %113 = dma.done [#allocation12], 16
    $region57: #{tpu_custom_call.1} parent=1 // pred_fallthru
      _
    %v115 = vld [vmem:[#allocation2] sm:$0xf]
    %v116 = vld [vmem:[#allocation5] sm:$0xff]
    %v117 = vld [vmem:[#allocation5 + $0x8] sm:$0xff]
    %v118 = vld [vmem:[#allocation5 + $0x10] sm:$0xff]
    %v119 = vld [vmem:[#allocation5 + $0x18] sm:$0xf]
    %v120 = vld [vmem:[#allocation5 + $0x1c] sm:$0xff]
    %v121 = vld [vmem:[#allocation5 + $0x24] sm:$0xff]
    %v122 = vld [vmem:[#allocation5 + $0x2c] sm:$0xff]
    %v123 = vld [vmem:[#allocation5 + $0x34] sm:$0xf]
    %v124 = vld [vmem:[#allocation5 + $0x38] sm:$0xff]
    %v125 = vld [vmem:[#allocation5 + $0x40] sm:$0xff]
    %v126 = vld [vmem:[#allocation5 + $0x48] sm:$0xff]
    %v127 = vld [vmem:[#allocation5 + $0x50] sm:$0xf]
    %v128 = vld [vmem:[#allocation7] sm:$0xff]
    %v130 = vlaneseq
    %v131 = vshrl.u32 %v130, 7
    %v132 = vsub.s32 0, %v131
    %v133 = vrot.slane %v128, %v132
    %v134 = vlaneseq
    %v135 = vshrl.u32 %v134, 7
    %v136 = vsub.s32 1, %v135
    %v137 = vrot.slane %v128, %v136
    %v138 = vlaneseq
    %v139 = vshrl.u32 %v138, 7
    %v140 = vsub.s32 2, %v139
    %v141 = vrot.slane %v128, %v140
    %v142 = vlaneseq
    %v143 = vshrl.u32 %v142, 7
    %v144 = vsub.s32 3, %v143
    %v145 = vrot.slane %v128, %v144
    %v146 = vlaneseq
    %v147 = vshrl.u32 %v146, 7
    %v148 = vsub.s32 4, %v147
    %v149 = vrot.slane %v128, %v148
    %v150 = vlaneseq
    %v151 = vshrl.u32 %v150, 7
    %v152 = vsub.s32 5, %v151
    %v153 = vrot.slane %v128, %v152
    %v154 = vlaneseq
    %v155 = vshrl.u32 %v154, 7
    %v156 = vsub.s32 6, %v155
    %v157 = vrot.slane %v128, %v156
    %v177 = vunpack.c.l.b16 %v116
    %v178 = vunpack.c.h.b16 %v116
    %v179 = vunpack.c.l.b16 %v117
    %v180 = vunpack.c.h.b16 %v117
    %v181 = vunpack.c.l.b16 %v118
    %v182 = vunpack.c.h.b16 %v118
    %v183 = vunpack.c.l.b16 %v119
    %v184 = vunpack.c.l.b16 %v120
    %v185 = vunpack.c.h.b16 %v120
    %v186 = vunpack.c.l.b16 %v121
    %v187 = vunpack.c.h.b16 %v121
    %v188 = vunpack.c.l.b16 %v122
    %v189 = vunpack.c.h.b16 %v122
    %v190 = vunpack.c.l.b16 %v123
    %v191 = vunpack.c.l.b16 %v124
    %v192 = vunpack.c.h.b16 %v124
    %v193 = vunpack.c.l.b16 %v125
    %v194 = vunpack.c.h.b16 %v125
    %v195 = vunpack.c.l.b16 %v126
    %v196 = vunpack.c.h.b16 %v126
    %v197 = vunpack.c.l.b16 %v127
    %v198 = vpack.c.b16 %v184, %v177
    %v199 = vpack.c.b16 %v185, %v178
    %v200 = vpack.c.b16 %v186, %v179
    %v201 = vpack.c.b16 %v187, %v180
    %v202 = vpack.c.b16 %v188, %v181
    %v203 = vpack.c.b16 %v189, %v182
    %v204 = vpack.c.b16 %v190, %v183
    %v205 = vpack.c.b16 %v191, %v191
    %v206 = vpack.c.b16 %v192, %v192
    %v207 = vpack.c.b16 %v193, %v193
    %v208 = vpack.c.b16 %v194, %v194
    %v209 = vpack.c.b16 %v195, %v195
    %v210 = vpack.c.b16 %v196, %v196
    %v211 = vpack.c.b16 %v197, %v197
    %vm219 = vcmask 195584
    %v221 = vsel %vm219, %v115, 0
    %vm223 = vcmask 1043456
    %v225 = vsel %vm223, %v205, 0
    %v228 = vsel %vm223, %v206, 0
    %v231 = vsel %vm223, %v207, 0
    %v234 = vsel %vm223, %v208, 0
    %v237 = vsel %vm223, %v209, 0
    %v240 = vsel %vm223, %v210, 0
    %v243 = vsel %vm223, %v211, 0
    %245 = vmatprep.subr.bf16.mxu0 %v199
    %246 = vmatpush1.bf16.msra.mxu0 %v198
    %247 = vmatprep.subr.bf16.mxu0 %v228
    %248 = vmatpush1.bf16.msra.mxu0 %v225
    %249 = vmatprep.subr.bf16.mxu0 0
    %250 = vmatpush1.bf16.msra.mxu0 0
    %251 = vmatprep.subr.bf16.mxu0 0
    %252 = vmatpush1.bf16.msra.mxu0 0
    %253 = vmatprep.subr.bf16.mxu0 0
    %254 = vmatpush1.bf16.msra.mxu0 0
    %255 = vmatprep.subr.bf16.mxu0 0
    %256 = vmatpush1.bf16.msra.mxu0 0
    %257 = vmatprep.subr.bf16.mxu0 0
    %258 = vmatpush1.bf16.msra.mxu0 0
    %259 = vmatprep.subr.bf16.mxu0 0
    %260 = vmatpush1.bf16.msra.mxu0 0
    %261 = vmatprep.subr.bf16.mxu0 0
    %262 = vmatpush1.bf16.msra.mxu0 0
    %263 = vmatprep.subr.bf16.mxu0 0
    %264 = vmatpush1.bf16.msra.mxu0 0
    %265 = vmatprep.subr.bf16.mxu0 0
    %266 = vmatpush1.bf16.msra.mxu0 0
    %267 = vmatprep.subr.bf16.mxu0 0
    %268 = vmatpush1.bf16.msra.mxu0 0
    %269 = vmatprep.subr.bf16.mxu0 0
    %270 = vmatpush1.bf16.msra.mxu0 0
    %271 = vmatprep.subr.bf16.mxu0 0
    %272 = vmatpush1.bf16.msra.mxu0 0
    %273 = vmatprep.subr.bf16.mxu0 0
    %274 = vmatpush1.bf16.msra.mxu0 0
    %275 = vmatprep.subr.bf16.mxu0 0
    %276 = vmatpush1.bf16.msra.mxu0 0
    %277 = vmatprep.mubr.bf16.mxu0 0
    %278 = vmatmul.mubr.bf16.gmra.mrb[0].mxu0 %v221
    %v279 = vpop.f32.mrb[0].mxu0
    %v280 = vadd.f32 %v133, %v279
    %v281 = vpop.f32.mrb[0].mxu0
    %v282 = vadd.f32 %v137, %v281
    %v283 = vpop.f32.mrb[0].mxu0
    %v284 = vpop.f32.mrb[0].mxu0
    %285 = vdwg.mxu0
    %286 = vmatprep.subr.bf16.mxu0 %v201
    %287 = vmatpush1.bf16.msra.mxu0 %v200
    %288 = vmatprep.subr.bf16.mxu0 %v234
    %289 = vmatpush1.bf16.msra.mxu0 %v231
    %290 = vmatprep.subr.bf16.mxu0 0
    %291 = vmatpush1.bf16.msra.mxu0 0
    %292 = vmatprep.subr.bf16.mxu0 0
    %293 = vmatpush1.bf16.msra.mxu0 0
    %294 = vmatprep.subr.bf16.mxu0 0
    %295 = vmatpush1.bf16.msra.mxu0 0
    %296 = vmatprep.subr.bf16.mxu0 0
    %297 = vmatpush1.bf16.msra.mxu0 0
    %298 = vmatprep.subr.bf16.mxu0 0
    %299 = vmatpush1.bf16.msra.mxu0 0
    %300 = vmatprep.subr.bf16.mxu0 0
    %301 = vmatpush1.bf16.msra.mxu0 0
    %302 = vmatprep.subr.bf16.mxu0 0
    %303 = vmatpush1.bf16.msra.mxu0 0
    %304 = vmatprep.subr.bf16.mxu0 0
    %305 = vmatpush1.bf16.msra.mxu0 0
    %306 = vmatprep.subr.bf16.mxu0 0
    %307 = vmatpush1.bf16.msra.mxu0 0
    %308 = vmatprep.subr.bf16.mxu0 0
    %309 = vmatpush1.bf16.msra.mxu0 0
    %310 = vmatprep.subr.bf16.mxu0 0
    %311 = vmatpush1.bf16.msra.mxu0 0
    %312 = vmatprep.subr.bf16.mxu0 0
    %313 = vmatpush1.bf16.msra.mxu0 0
    %314 = vmatprep.subr.bf16.mxu0 0
    %315 = vmatpush1.bf16.msra.mxu0 0
    %316 = vmatprep.subr.bf16.mxu0 0
    %317 = vmatpush1.bf16.msra.mxu0 0
    %318 = vmatprep.mubr.bf16.mxu0 0
    %319 = vmatmul.mubr.bf16.gmra.mrb[0].mxu0 %v221
    %v320 = vpop.f32.mrb[0].mxu0
    %v321 = vadd.f32 %v141, %v320
    %v322 = vpop.f32.mrb[0].mxu0
    %v323 = vadd.f32 %v145, %v322
    %v324 = vpop.f32.mrb[0].mxu0
    %v325 = vpop.f32.mrb[0].mxu0
    %326 = vdwg.mxu0
    %327 = vmatprep.subr.bf16.mxu0 %v203
    %328 = vmatpush1.bf16.msra.mxu0 %v202
    %329 = vmatprep.subr.bf16.mxu0 %v240
    %330 = vmatpush1.bf16.msra.mxu0 %v237
    %331 = vmatprep.subr.bf16.mxu0 0
    %332 = vmatpush1.bf16.msra.mxu0 0
    %333 = vmatprep.subr.bf16.mxu0 0
    %334 = vmatpush1.bf16.msra.mxu0 0
    %335 = vmatprep.subr.bf16.mxu0 0
    %336 = vmatpush1.bf16.msra.mxu0 0
    %337 = vmatprep.subr.bf16.mxu0 0
    %338 = vmatpush1.bf16.msra.mxu0 0
    %339 = vmatprep.subr.bf16.mxu0 0
    %340 = vmatpush1.bf16.msra.mxu0 0
    %341 = vmatprep.subr.bf16.mxu0 0
    %342 = vmatpush1.bf16.msra.mxu0 0
    %343 = vmatprep.subr.bf16.mxu0 0
    %344 = vmatpush1.bf16.msra.mxu0 0
    %345 = vmatprep.subr.bf16.mxu0 0
    %346 = vmatpush1.bf16.msra.mxu0 0
    %347 = vmatprep.subr.bf16.mxu0 0
    %348 = vmatpush1.bf16.msra.mxu0 0
    %349 = vmatprep.subr.bf16.mxu0 0
    %350 = vmatpush1.bf16.msra.mxu0 0
    %351 = vmatprep.subr.bf16.mxu0 0
    %352 = vmatpush1.bf16.msra.mxu0 0
    %353 = vmatprep.subr.bf16.mxu0 0
    %354 = vmatpush1.bf16.msra.mxu0 0
    %355 = vmatprep.subr.bf16.mxu0 0
    %356 = vmatpush1.bf16.msra.mxu0 0
    %357 = vmatprep.subr.bf16.mxu0 0
    %358 = vmatpush1.bf16.msra.mxu0 0
    %359 = vmatprep.mubr.bf16.mxu0 0
    %360 = vmatmul.mubr.bf16.gmra.mrb[0].mxu0 %v221
    %v361 = vpop.f32.mrb[0].mxu0
    %v362 = vadd.f32 %v149, %v361
    %v363 = vpop.f32.mrb[0].mxu0
    %v364 = vadd.f32 %v153, %v363
    %v365 = vpop.f32.mrb[0].mxu0
    %v366 = vpop.f32.mrb[0].mxu0
    %367 = vdwg.mxu0
    %368 = vmatprep.subr.bf16.mxu0 0
    %369 = vmatpush1.bf16.msra.mxu0 %v204
    %370 = vmatprep.subr.bf16.mxu0 0
    %371 = vmatpush1.bf16.msra.mxu0 %v243
    %372 = vmatprep.subr.bf16.mxu0 0
    %373 = vmatpush1.bf16.msra.mxu0 0
    %374 = vmatprep.subr.bf16.mxu0 0
    %375 = vmatpush1.bf16.msra.mxu0 0
    %376 = vmatprep.subr.bf16.mxu0 0
    %377 = vmatpush1.bf16.msra.mxu0 0
    %378 = vmatprep.subr.bf16.mxu0 0
    %379 = vmatpush1.bf16.msra.mxu0 0
    %380 = vmatprep.subr.bf16.mxu0 0
    %381 = vmatpush1.bf16.msra.mxu0 0
    %382 = vmatprep.subr.bf16.mxu0 0
    %383 = vmatpush1.bf16.msra.mxu0 0
    %384 = vmatprep.subr.bf16.mxu0 0
    %385 = vmatpush1.bf16.msra.mxu0 0
    %386 = vmatprep.subr.bf16.mxu0 0
    %387 = vmatpush1.bf16.msra.mxu0 0
    %388 = vmatprep.subr.bf16.mxu0 0
    %389 = vmatpush1.bf16.msra.mxu0 0
    %390 = vmatprep.subr.bf16.mxu0 0
    %391 = vmatpush1.bf16.msra.mxu0 0
    %392 = vmatprep.subr.bf16.mxu0 0
    %393 = vmatpush1.bf16.msra.mxu0 0
    %394 = vmatprep.subr.bf16.mxu0 0
    %395 = vmatpush1.bf16.msra.mxu0 0
    %396 = vmatprep.subr.bf16.mxu0 0
    %397 = vmatpush1.bf16.msra.mxu0 0
    %398 = vmatprep.subr.bf16.mxu0 0
    %399 = vmatpush1.bf16.msra.mxu0 0
    %400 = vmatprep.mubr.bf16.mxu0 0
    %401 = vmatmul.mubr.bf16.gmra.mrb[0].mxu0 %v221
    %v402 = vpop.f32.mrb[0].mxu0
    %v403 = vadd.f32 %v157, %v402
    %v404 = vpop.f32.mrb[0].mxu0
    %v405 = vpop.f32.mrb[0].mxu0
    %v406 = vpop.f32.mrb[0].mxu0
    %407 = vdwg.mxu0
    %v408 = vmax.f32 %v280, 0.0
    %v409 = vmax.f32 %v282, 0.0
    %v410 = vmax.f32 %v321, 0.0
    %v411 = vmax.f32 %v323, 0.0
    %v412 = vmax.f32 %v362, 0.0
    %v413 = vmax.f32 %v364, 0.0
    %v414 = vmax.f32 %v403, 0.0
    %v415 = vpack.c.bf16 %v408, %v408
    %v416 = vpack.c.bf16 %v409, %v409
    %v417 = vpack.c.bf16 %v410, %v410
    %v418 = vpack.c.bf16 %v411, %v411
    %v419 = vpack.c.bf16 %v412, %v412
    %v420 = vpack.c.bf16 %v413, %v413
    %v421 = vpack.c.bf16 %v414, %v414
    %v422 = vld [vmem:[#allocation8] sm:$0xff]
    %v423 = vld [vmem:[#allocation8 + $0x8] sm:$0xff]
    %v424 = vld [vmem:[#allocation8 + $0x10] sm:$0xf]
    %v425 = vld [vmem:[#allocation8 + $0x14] sm:$0xff]
    %v426 = vld [vmem:[#allocation8 + $0x1c] sm:$0xff]
    %v427 = vld [vmem:[#allocation8 + $0x24] sm:$0xf]
    %v428 = vld [vmem:[#allocation8 + $0x28] sm:$0xff]
    %v429 = vld [vmem:[#allocation8 + $0x30] sm:$0xff]
    %v430 = vld [vmem:[#allocation8 + $0x38] sm:$0xf]
    %v431 = vld [vmem:[#allocation8 + $0x3c] sm:$0xff]
    %v432 = vld [vmem:[#allocation8 + $0x44] sm:$0xff]
    %v433 = vld [vmem:[#allocation8 + $0x4c] sm:$0xf]
    %v434 = vld [vmem:[#allocation8 + $0x50] sm:$0xff]
    %v435 = vld [vmem:[#allocation8 + $0x58] sm:$0xff]
    %v436 = vld [vmem:[#allocation8 + $0x60] sm:$0xf]
    %v437 = vld [vmem:[#allocation8 + $0x64] sm:$0xff]
    %v438 = vld [vmem:[#allocation8 + $0x6c] sm:$0xff]
    %v439 = vld [vmem:[#allocation8 + $0x74] sm:$0xf]
    %v440 = vld [vmem:[#allocation8 + $0x78] sm:$0xff]
    %v441 = vld [vmem:[#allocation8 + $0x80] sm:$0xff]
    %v442 = vld [vmem:[#allocation8 + $0x88] sm:$0xf]
    %v443 = vld [vmem:[#allocation8 + $0x8c] sm:$0xff]
    %v444 = vld [vmem:[#allocation8 + $0x94] sm:$0xff]
    %v445 = vld [vmem:[#allocation8 + $0x9c] sm:$0xf]
    %v446 = vld [vmem:[#allocation8 + $0xa0] sm:$0xff]
    %v447 = vld [vmem:[#allocation8 + $0xa8] sm:$0xff]
    %v448 = vld [vmem:[#allocation8 + $0xb0] sm:$0xf]
    %v449 = vld [vmem:[#allocation8 + $0xb4] sm:$0xff]
    %v450 = vld [vmem:[#allocation8 + $0xbc] sm:$0xff]
    %v451 = vld [vmem:[#allocation8 + $0xc4] sm:$0xf]
    %v452 = vld [vmem:[#allocation8 + $0xc8] sm:$0xff]
    %v453 = vld [vmem:[#allocation8 + $0xd0] sm:$0xff]
    %v454 = vld [vmem:[#allocation8 + $0xd8] sm:$0xf]
    %v455 = vld [vmem:[#allocation8 + $0xdc] sm:$0xff]
    %v456 = vld [vmem:[#allocation8 + $0xe4] sm:$0xff]
    %v457 = vld [vmem:[#allocation8 + $0xec] sm:$0xf]
    %v458 = vld [vmem:[#allocation8 + $0xf0] sm:$0xff]
    %v459 = vld [vmem:[#allocation8 + $0xf8] sm:$0xff]
    %v460 = vld [vmem:[#allocation8 + $0x100] sm:$0xf]
    %v461 = vld [vmem:[#allocation8 + $0x104] sm:$0xff]
    %v462 = vld [vmem:[#allocation8 + $0x10c] sm:$0xff]
    %v463 = vld [vmem:[#allocation8 + $0x114] sm:$0xf]
    %v464 = vld [vmem:[#allocation8 + $0x118] sm:$0xff]
    %v465 = vld [vmem:[#allocation8 + $0x120] sm:$0xff]
    %v466 = vld [vmem:[#allocation8 + $0x128] sm:$0xf]
    %v467 = vld [vmem:[#allocation8 + $0x12c] sm:$0xff]
    %v468 = vld [vmem:[#allocation8 + $0x134] sm:$0xff]
    %v469 = vld [vmem:[#allocation8 + $0x13c] sm:$0xf]
    %v470 = vld [vmem:[#allocation8 + $0x140] sm:$0xff]
    %v471 = vld [vmem:[#allocation8 + $0x148] sm:$0xff]
    %v472 = vld [vmem:[#allocation8 + $0x150] sm:$0xf]
    %v473 = vld [vmem:[#allocation8 + $0x154] sm:$0xff]
    %v474 = vld [vmem:[#allocation8 + $0x15c] sm:$0xff]
    %v475 = vld [vmem:[#allocation8 + $0x164] sm:$0xf]
    %v476 = vld [vmem:[#allocation8 + $0x168] sm:$0xff]
    %v477 = vld [vmem:[#allocation8 + $0x170] sm:$0xff]
    %v478 = vld [vmem:[#allocation8 + $0x178] sm:$0xf]
    %v479 = vld [vmem:[#allocation8 + $0x17c] sm:$0xff]
    %v480 = vld [vmem:[#allocation8 + $0x184] sm:$0xff]
    %v481 = vld [vmem:[#allocation8 + $0x18c] sm:$0xf]
    %v482 = vld [vmem:[#allocation8 + $0x190] sm:$0xff]
    %v483 = vld [vmem:[#allocation8 + $0x198] sm:$0xff]
    %v484 = vld [vmem:[#allocation8 + $0x1a0] sm:$0xf]
    %v485 = vld [vmem:[#allocation8 + $0x1a4] sm:$0xff]
    %v486 = vld [vmem:[#allocation8 + $0x1ac] sm:$0xff]
    %v487 = vld [vmem:[#allocation8 + $0x1b4] sm:$0xf]
    %v488 = vld [vmem:[#allocation8 + $0x1b8] sm:$0xff]
    %v489 = vld [vmem:[#allocation8 + $0x1c0] sm:$0xff]
    %v490 = vld [vmem:[#allocation8 + $0x1c8] sm:$0xf]
    %v491 = vld [vmem:[#allocation8 + $0x1cc] sm:$0xff]
    %v492 = vld [vmem:[#allocation8 + $0x1d4] sm:$0xff]
    %v493 = vld [vmem:[#allocation8 + $0x1dc] sm:$0xf]
    %v494 = vld [vmem:[#allocation8 + $0x1e0] sm:$0xff]
    %v495 = vld [vmem:[#allocation8 + $0x1e8] sm:$0xff]
    %v496 = vld [vmem:[#allocation8 + $0x1f0] sm:$0xf]
    %v497 = vld [vmem:[#allocation8 + $0x1f4] sm:$0xff]
    %v498 = vld [vmem:[#allocation8 + $0x1fc] sm:$0xff]
    %v499 = vld [vmem:[#allocation8 + $0x204] sm:$0xf]
    %v500 = vld [vmem:[#allocation8 + $0x208] sm:$0xff]
    %v501 = vld [vmem:[#allocation8 + $0x210] sm:$0xff]
    %v502 = vld [vmem:[#allocation8 + $0x218] sm:$0xf]
    %v503 = vld [vmem:[#allocation8 + $0x21c] sm:$0xff]
    %v504 = vld [vmem:[#allocation8 + $0x224] sm:$0xff]
    %v505 = vld [vmem:[#allocation8 + $0x22c] sm:$0xf]
    %v506 = vld [vmem:[#allocation8 + $0x230] sm:$0xff]
    %v507 = vld [vmem:[#allocation8 + $0x238] sm:$0xff]
    %v508 = vld [vmem:[#allocation8 + $0x240] sm:$0xf]
    %v509 = vld [vmem:[#allocation8 + $0x244] sm:$0xff]
    %v510 = vld [vmem:[#allocation8 + $0x24c] sm:$0xff]
    %v511 = vld [vmem:[#allocation8 + $0x254] sm:$0xf]
    %v512 = vld [vmem:[#allocation8 + $0x258] sm:$0xff]
    %v513 = vld [vmem:[#allocation8 + $0x260] sm:$0xff]
    %v514 = vld [vmem:[#allocation8 + $0x268] sm:$0xf]
    %v515 = vld [vmem:[#allocation8 + $0x26c] sm:$0xff]
    %v516 = vld [vmem:[#allocation8 + $0x274] sm:$0xff]
    %v517 = vld [vmem:[#allocation8 + $0x27c] sm:$0xf]
    %v518 = vld [vmem:[#allocation8 + $0x280] sm:$0xff]
    %v519 = vld [vmem:[#allocation8 + $0x288] sm:$0xff]
    %v520 = vld [vmem:[#allocation8 + $0x290] sm:$0xf]
    %v521 = vld [vmem:[#allocation8 + $0x294] sm:$0xff]
    %v522 = vld [vmem:[#allocation8 + $0x29c] sm:$0xff]
    %v523 = vld [vmem:[#allocation8 + $0x2a4] sm:$0xf]
    %v524 = vld [vmem:[#allocation8 + $0x2a8] sm:$0xff]
    %v525 = vld [vmem:[#allocation8 + $0x2b0] sm:$0xff]
    %v526 = vld [vmem:[#allocation8 + $0x2b8] sm:$0xf]
    %v527 = vld [vmem:[#allocation8 + $0x2bc] sm:$0xff]
    %v528 = vld [vmem:[#allocation8 + $0x2c4] sm:$0xff]
    %v529 = vld [vmem:[#allocation8 + $0x2cc] sm:$0xf]
    %v530 = vld [vmem:[#allocation8 + $0x2d0] sm:$0xff]
    %v531 = vld [vmem:[#allocation8 + $0x2d8] sm:$0xff]
    %v532 = vld [vmem:[#allocation8 + $0x2e0] sm:$0xf]
    %v533 = vld [vmem:[#allocation8 + $0x2e4] sm:$0xff]
    %v534 = vld [vmem:[#allocation8 + $0x2ec] sm:$0xff]
    %v535 = vld [vmem:[#allocation8 + $0x2f4] sm:$0xf]
    %v536 = vld [vmem:[#allocation8 + $0x2f8] sm:$0xff]
    %v537 = vld [vmem:[#allocation8 + $0x300] sm:$0xff]
    %v538 = vld [vmem:[#allocation8 + $0x308] sm:$0xf]
    %v539 = vld [vmem:[#allocation8 + $0x30c] sm:$0xff]
    %v540 = vld [vmem:[#allocation8 + $0x314] sm:$0xff]
    %v541 = vld [vmem:[#allocation8 + $0x31c] sm:$0xf]
    %v542 = vld [vmem:[#allocation8 + $0x320] sm:$0xff]
    %v543 = vld [vmem:[#allocation8 + $0x328] sm:$0xff]
    %v544 = vld [vmem:[#allocation8 + $0x330] sm:$0xf]
    %v545 = vld [vmem:[#allocation8 + $0x334] sm:$0xff]
    %v546 = vld [vmem:[#allocation8 + $0x33c] sm:$0xff]
    %v547 = vld [vmem:[#allocation8 + $0x344] sm:$0xf]
    %v548 = vld [vmem:[#allocation8 + $0x348] sm:$0xff]
    %v549 = vld [vmem:[#allocation8 + $0x350] sm:$0xff]
    %v550 = vld [vmem:[#allocation8 + $0x358] sm:$0xf]
    %v551 = vld [vmem:[#allocation8 + $0x35c] sm:$0xff]
    %v552 = vld [vmem:[#allocation8 + $0x364] sm:$0xff]
    %v553 = vld [vmem:[#allocation8 + $0x36c] sm:$0xf]
    %v554 = vld [vmem:[#allocation8 + $0x370] sm:$0xff]
    %v555 = vld [vmem:[#allocation8 + $0x378] sm:$0xff]
    %v556 = vld [vmem:[#allocation8 + $0x380] sm:$0xf]
    %v557 = vld [vmem:[#allocation8 + $0x384] sm:$0xff]
    %v558 = vld [vmem:[#allocation8 + $0x38c] sm:$0xff]
    %v559 = vld [vmem:[#allocation8 + $0x394] sm:$0xf]
    %v560 = vld [vmem:[#allocation8 + $0x398] sm:$0xff]
    %v561 = vld [vmem:[#allocation8 + $0x3a0] sm:$0xff]
    %v562 = vld [vmem:[#allocation8 + $0x3a8] sm:$0xf]
    %v563 = vld [vmem:[#allocation8 + $0x3ac] sm:$0xff]
    %v564 = vld [vmem:[#allocation8 + $0x3b4] sm:$0xff]
    %v565 = vld [vmem:[#allocation8 + $0x3bc] sm:$0xf]
    %v566 = vld [vmem:[#allocation8 + $0x3c0] sm:$0xff]
    %v567 = vld [vmem:[#allocation8 + $0x3c8] sm:$0xff]
    %v568 = vld [vmem:[#allocation8 + $0x3d0] sm:$0xf]
    %v569 = vld [vmem:[#allocation8 + $0x3d4] sm:$0xff]
    %v570 = vld [vmem:[#allocation8 + $0x3dc] sm:$0xff]
    %v571 = vld [vmem:[#allocation8 + $0x3e4] sm:$0xf]
    %v572 = vld [vmem:[#allocation8 + $0x3e8] sm:$0xff]
    %v573 = vld [vmem:[#allocation8 + $0x3f0] sm:$0xff]
    %v574 = vld [vmem:[#allocation8 + $0x3f8] sm:$0xf]
    %v575 = vld [vmem:[#allocation8 + $0x3fc] sm:$0xff]
    %v576 = vld [vmem:[#allocation8 + $0x404] sm:$0xff]
    %v577 = vld [vmem:[#allocation8 + $0x40c] sm:$0xf]
    %v578 = vld [vmem:[#allocation8 + $0x410] sm:$0xff]
    %v579 = vld [vmem:[#allocation8 + $0x418] sm:$0xff]
    %v580 = vld [vmem:[#allocation8 + $0x420] sm:$0xf]
    %v581 = vld [vmem:[#allocation8 + $0x424] sm:$0xff]
    %v582 = vld [vmem:[#allocation8 + $0x42c] sm:$0xff]
    %v583 = vld [vmem:[#allocation8 + $0x434] sm:$0xf]
    %v584 = vld [vmem:[#allocation8 + $0x438] sm:$0xff]
    %v585 = vld [vmem:[#allocation8 + $0x440] sm:$0xff]
    %v586 = vld [vmem:[#allocation8 + $0x448] sm:$0xf]
    %v587 = vld [vmem:[#allocation8 + $0x44c] sm:$0xff]
    %v588 = vld [vmem:[#allocation8 + $0x454] sm:$0xff]
    %v589 = vld [vmem:[#allocation8 + $0x45c] sm:$0xf]
    %v590 = vld [vmem:[#allocation8 + $0x460] sm:$0xff]
    %v591 = vld [vmem:[#allocation8 + $0x468] sm:$0xff]
    %v592 = vld [vmem:[#allocation8 + $0x470] sm:$0xf]
    %v593 = vld [vmem:[#allocation8 + $0x474] sm:$0xff]
    %v594 = vld [vmem:[#allocation8 + $0x47c] sm:$0xff]
    %v595 = vld [vmem:[#allocation8 + $0x484] sm:$0xf]
    %v596 = vld [vmem:[#allocation8 + $0x488] sm:$0xff]
    %v597 = vld [vmem:[#allocation8 + $0x490] sm:$0xff]
    %v598 = vld [vmem:[#allocation8 + $0x498] sm:$0xf]
    %v599 = vld [vmem:[#allocation8 + $0x49c] sm:$0xff]
    %v600 = vld [vmem:[#allocation8 + $0x4a4] sm:$0xff]
    %v601 = vld [vmem:[#allocation8 + $0x4ac] sm:$0xf]
    %v602 = vld [vmem:[#allocation8 + $0x4b0] sm:$0xff]
    %v603 = vld [vmem:[#allocation8 + $0x4b8] sm:$0xff]
    %v604 = vld [vmem:[#allocation8 + $0x4c0] sm:$0xf]
    %v605 = vld [vmem:[#allocation8 + $0x4c4] sm:$0xff]
    %v606 = vld [vmem:[#allocation8 + $0x4cc] sm:$0xff]
    %v607 = vld [vmem:[#allocation8 + $0x4d4] sm:$0xf]
    %v608 = vld [vmem:[#allocation8 + $0x4d8] sm:$0xff]
    %v609 = vld [vmem:[#allocation8 + $0x4e0] sm:$0xff]
    %v610 = vld [vmem:[#allocation8 + $0x4e8] sm:$0xf]
    %v611 = vld [vmem:[#allocation8 + $0x4ec] sm:$0xff]
    %v612 = vld [vmem:[#allocation8 + $0x4f4] sm:$0xff]
    %v613 = vld [vmem:[#allocation8 + $0x4fc] sm:$0xf]
    %v614 = vld [vmem:[#allocation8 + $0x500] sm:$0xff]
    %v615 = vld [vmem:[#allocation8 + $0x508] sm:$0xff]
    %v616 = vld [vmem:[#allocation8 + $0x510] sm:$0xf]
    %v617 = vld [vmem:[#allocation8 + $0x514] sm:$0xff]
    %v618 = vld [vmem:[#allocation8 + $0x51c] sm:$0xff]
    %v619 = vld [vmem:[#allocation8 + $0x524] sm:$0xf]
    %v620 = vld [vmem:[#allocation8 + $0x528] sm:$0xff]
    %v621 = vld [vmem:[#allocation8 + $0x530] sm:$0xff]
    %v622 = vld [vmem:[#allocation8 + $0x538] sm:$0xf]
    %v623 = vld [vmem:[#allocation8 + $0x53c] sm:$0xff]
    %v624 = vld [vmem:[#allocation8 + $0x544] sm:$0xff]
    %v625 = vld [vmem:[#allocation8 + $0x54c] sm:$0xf]
    %v626 = vld [vmem:[#allocation8 + $0x550] sm:$0xff]
    %v627 = vld [vmem:[#allocation8 + $0x558] sm:$0xff]
    %v628 = vld [vmem:[#allocation8 + $0x560] sm:$0xf]
    %v629 = vld [vmem:[#allocation8 + $0x564] sm:$0xff]
    %v630 = vld [vmem:[#allocation8 + $0x56c] sm:$0xff]
    %v631 = vld [vmem:[#allocation8 + $0x574] sm:$0xf]
    %v632 = vld [vmem:[#allocation8 + $0x578] sm:$0xff]
    %v633 = vld [vmem:[#allocation8 + $0x580] sm:$0xff]
    %v634 = vld [vmem:[#allocation8 + $0x588] sm:$0xf]
    %v635 = vld [vmem:[#allocation8 + $0x58c] sm:$0xff]
    %v636 = vld [vmem:[#allocation8 + $0x594] sm:$0xff]
    %v637 = vld [vmem:[#allocation8 + $0x59c] sm:$0xf]
    %v638 = vld [vmem:[#allocation8 + $0x5a0] sm:$0xff]
    %v639 = vld [vmem:[#allocation8 + $0x5a8] sm:$0xff]
    %v640 = vld [vmem:[#allocation8 + $0x5b0] sm:$0xf]
    %v641 = vld [vmem:[#allocation8 + $0x5b4] sm:$0xff]
    %v642 = vld [vmem:[#allocation8 + $0x5bc] sm:$0xff]
    %v643 = vld [vmem:[#allocation8 + $0x5c4] sm:$0xf]
    %v644 = vld [vmem:[#allocation8 + $0x5c8] sm:$0xff]
    %v645 = vld [vmem:[#allocation8 + $0x5d0] sm:$0xff]
    %v646 = vld [vmem:[#allocation8 + $0x5d8] sm:$0xf]
    %v647 = vld [vmem:[#allocation8 + $0x5dc] sm:$0xff]
    %v648 = vld [vmem:[#allocation8 + $0x5e4] sm:$0xff]
    %v649 = vld [vmem:[#allocation8 + $0x5ec] sm:$0xf]
    %v650 = vld [vmem:[#allocation8 + $0x5f0] sm:$0xff]
    %v651 = vld [vmem:[#allocation8 + $0x5f8] sm:$0xff]
    %v652 = vld [vmem:[#allocation8 + $0x600] sm:$0xf]
    %v653 = vld [vmem:[#allocation8 + $0x604] sm:$0xff]
    %v654 = vld [vmem:[#allocation8 + $0x60c] sm:$0xff]
    %v655 = vld [vmem:[#allocation8 + $0x614] sm:$0xf]
    %v656 = vld [vmem:[#allocation8 + $0x618] sm:$0xff]
    %v657 = vld [vmem:[#allocation8 + $0x620] sm:$0xff]
    %v658 = vld [vmem:[#allocation8 + $0x628] sm:$0xf]
    %v659 = vld [vmem:[#allocation8 + $0x62c] sm:$0xff]
    %v660 = vld [vmem:[#allocation8 + $0x634] sm:$0xff]
    %v661 = vld [vmem:[#allocation8 + $0x63c] sm:$0xf]
    %v662 = vld [vmem:[#allocation8 + $0x640] sm:$0xff]
    %v663 = vld [vmem:[#allocation8 + $0x648] sm:$0xff]
    %v664 = vld [vmem:[#allocation8 + $0x650] sm:$0xf]
    %v665 = vld [vmem:[#allocation8 + $0x654] sm:$0xff]
    %v666 = vld [vmem:[#allocation8 + $0x65c] sm:$0xff]
    %v667 = vld [vmem:[#allocation8 + $0x664] sm:$0xf]
    %v668 = vld [vmem:[#allocation8 + $0x668] sm:$0xff]
    %v669 = vld [vmem:[#allocation8 + $0x670] sm:$0xff]
    %v670 = vld [vmem:[#allocation8 + $0x678] sm:$0xf]
    %v671 = vld [vmem:[#allocation8 + $0x67c] sm:$0xff]
    %v672 = vld [vmem:[#allocation8 + $0x684] sm:$0xff]
    %v673 = vld [vmem:[#allocation8 + $0x68c] sm:$0xf]
    %v674 = vld [vmem:[#allocation8 + $0x690] sm:$0xff]
    %v675 = vld [vmem:[#allocation8 + $0x698] sm:$0xff]
    %v676 = vld [vmem:[#allocation8 + $0x6a0] sm:$0xf]
    %v677 = vld [vmem:[#allocation8 + $0x6a4] sm:$0xff]
    %v678 = vld [vmem:[#allocation8 + $0x6ac] sm:$0xff]
    %v679 = vld [vmem:[#allocation8 + $0x6b4] sm:$0xf]
    %v680 = vld [vmem:[#allocation8 + $0x6b8] sm:$0xff]
    %v681 = vld [vmem:[#allocation8 + $0x6c0] sm:$0xff]
    %v682 = vld [vmem:[#allocation8 + $0x6c8] sm:$0xf]
    %v683 = vld [vmem:[#allocation8 + $0x6cc] sm:$0xff]
    %v684 = vld [vmem:[#allocation8 + $0x6d4] sm:$0xff]
    %v685 = vld [vmem:[#allocation8 + $0x6dc] sm:$0xf]
    %v686 = vld [vmem:[#allocation8 + $0x6e0] sm:$0xff]
    %v687 = vld [vmem:[#allocation8 + $0x6e8] sm:$0xff]
    %v688 = vld [vmem:[#allocation8 + $0x6f0] sm:$0xf]
    %v689 = vld [vmem:[#allocation8 + $0x6f4] sm:$0xff]
    %v690 = vld [vmem:[#allocation8 + $0x6fc] sm:$0xff]
    %v691 = vld [vmem:[#allocation8 + $0x704] sm:$0xf]
    %v692 = vld [vmem:[#allocation8 + $0x708] sm:$0xff]
    %v693 = vld [vmem:[#allocation8 + $0x710] sm:$0xff]
    %v694 = vld [vmem:[#allocation8 + $0x718] sm:$0xf]
    %v695 = vld [vmem:[#allocation8 + $0x71c] sm:$0xff]
    %v696 = vld [vmem:[#allocation8 + $0x724] sm:$0xff]
    %v697 = vld [vmem:[#allocation8 + $0x72c] sm:$0xf]
    %v698 = vld [vmem:[#allocation8 + $0x730] sm:$0xff]
    %v699 = vld [vmem:[#allocation8 + $0x738] sm:$0xff]
    %v700 = vld [vmem:[#allocation8 + $0x740] sm:$0xf]
    %v701 = vld [vmem:[#allocation8 + $0x744] sm:$0xff]
    %v702 = vld [vmem:[#allocation8 + $0x74c] sm:$0xff]
    %v703 = vld [vmem:[#allocation8 + $0x754] sm:$0xf]
    %v704 = vld [vmem:[#allocation8 + $0x758] sm:$0xff]
    %v705 = vld [vmem:[#allocation8 + $0x760] sm:$0xff]
    %v706 = vld [vmem:[#allocation8 + $0x768] sm:$0xf]
    %v707 = vld [vmem:[#allocation8 + $0x76c] sm:$0xff]
    %v708 = vld [vmem:[#allocation8 + $0x774] sm:$0xff]
    %v709 = vld [vmem:[#allocation8 + $0x77c] sm:$0xf]
    %v710 = vld [vmem:[#allocation8 + $0x780] sm:$0xff]
    %v711 = vld [vmem:[#allocation8 + $0x788] sm:$0xff]
    %v712 = vld [vmem:[#allocation8 + $0x790] sm:$0xf]
    %v713 = vld [vmem:[#allocation8 + $0x794] sm:$0xff]
    %v714 = vld [vmem:[#allocation8 + $0x79c] sm:$0xff]
    %v715 = vld [vmem:[#allocation8 + $0x7a4] sm:$0xf]
    %v716 = vld [vmem:[#allocation8 + $0x7a8] sm:$0xff]
    %v717 = vld [vmem:[#allocation8 + $0x7b0] sm:$0xff]
    %v718 = vld [vmem:[#allocation8 + $0x7b8] sm:$0xf]
    %v719 = vld [vmem:[#allocation8 + $0x7bc] sm:$0xff]
    %v720 = vld [vmem:[#allocation8 + $0x7c4] sm:$0xff]
    %v721 = vld [vmem:[#allocation8 + $0x7cc] sm:$0xf]
    %v722 = vld [vmem:[#allocation8 + $0x7d0] sm:$0xff]
    %v723 = vld [vmem:[#allocation8 + $0x7d8] sm:$0xff]
    %v724 = vld [vmem:[#allocation8 + $0x7e0] sm:$0xf]
    %v725 = vld [vmem:[#allocation8 + $0x7e4] sm:$0xff]
    %v726 = vld [vmem:[#allocation8 + $0x7ec] sm:$0xff]
    %v727 = vld [vmem:[#allocation8 + $0x7f4] sm:$0xf]
    %v728 = vld [vmem:[#allocation8 + $0x7f8] sm:$0xff]
    %v729 = vld [vmem:[#allocation8 + $0x800] sm:$0xff]
    %v730 = vld [vmem:[#allocation8 + $0x808] sm:$0xf]
    %v731 = vld [vmem:[#allocation8 + $0x80c] sm:$0xff]
    %v732 = vld [vmem:[#allocation8 + $0x814] sm:$0xff]
    %v733 = vld [vmem:[#allocation8 + $0x81c] sm:$0xf]
    %v734 = vld [vmem:[#allocation8 + $0x820] sm:$0xff]
    %v735 = vld [vmem:[#allocation8 + $0x828] sm:$0xff]
    %v736 = vld [vmem:[#allocation8 + $0x830] sm:$0xf]
    %v737 = vld [vmem:[#allocation8 + $0x834] sm:$0xff]
    %v738 = vld [vmem:[#allocation8 + $0x83c] sm:$0xff]
    %v739 = vld [vmem:[#allocation8 + $0x844] sm:$0xf]
    %v740 = vld [vmem:[#allocation8 + $0x848] sm:$0xff]
    %v741 = vld [vmem:[#allocation8 + $0x850] sm:$0xff]
    %v742 = vld [vmem:[#allocation8 + $0x858] sm:$0xf]
    %v743 = vld [vmem:[#allocation8 + $0x85c] sm:$0xff]
    %v744 = vld [vmem:[#allocation8 + $0x864] sm:$0xff]
    %v745 = vld [vmem:[#allocation8 + $0x86c] sm:$0xf]
    %v746 = vld [vmem:[#allocation8 + $0x870] sm:$0xff]
    %v747 = vld [vmem:[#allocation8 + $0x878] sm:$0xff]
    %v748 = vld [vmem:[#allocation8 + $0x880] sm:$0xf]
    %v749 = vld [vmem:[#allocation8 + $0x884] sm:$0xff]
    %v750 = vld [vmem:[#allocation8 + $0x88c] sm:$0xff]
    %v751 = vld [vmem:[#allocation8 + $0x894] sm:$0xf]
    %v752 = vld [vmem:[#allocation8 + $0x898] sm:$0xff]
    %v753 = vld [vmem:[#allocation8 + $0x8a0] sm:$0xff]
    %v754 = vld [vmem:[#allocation8 + $0x8a8] sm:$0xf]
    %v755 = vld [vmem:[#allocation8 + $0x8ac] sm:$0xff]
    %v756 = vld [vmem:[#allocation8 + $0x8b4] sm:$0xff]
    %v757 = vld [vmem:[#allocation8 + $0x8bc] sm:$0xf]
    %v758 = vld [vmem:[#allocation10] sm:$0x1f]
    %v760 = vlaneseq
    %v761 = vshrl.u32 %v760, 7
    %v762 = vsub.s32 0, %v761
    %v763 = vrot.slane %v758, %v762
    %v764 = vlaneseq
    %v765 = vshrl.u32 %v764, 7
    %v766 = vsub.s32 1, %v765
    %v767 = vrot.slane %v758, %v766
    %v768 = vlaneseq
    %v769 = vshrl.u32 %v768, 7
    %v770 = vsub.s32 2, %v769
    %v771 = vrot.slane %v758, %v770
    %v772 = vlaneseq
    %v773 = vshrl.u32 %v772, 7
    %v774 = vsub.s32 3, %v773
    %v775 = vrot.slane %v758, %v774
    %v776 = vlaneseq
    %v777 = vshrl.u32 %v776, 7
    %v778 = vsub.s32 4, %v777
    %v779 = vrot.slane %v758, %v778
    %v1121 = vunpack.c.l.b16 %v422
    %v1122 = vunpack.c.h.b16 %v422
    %v1123 = vunpack.c.l.b16 %v423
    %v1124 = vunpack.c.h.b16 %v423
    %v1125 = vunpack.c.l.b16 %v424
    %v1126 = vunpack.c.l.b16 %v425
    %v1127 = vunpack.c.h.b16 %v425
    %v1128 = vunpack.c.l.b16 %v426
    %v1129 = vunpack.c.h.b16 %v426
    %v1130 = vunpack.c.l.b16 %v427
    %v1131 = vunpack.c.l.b16 %v428
    %v1132 = vunpack.c.h.b16 %v428
    %v1133 = vunpack.c.l.b16 %v429
    %v1134 = vunpack.c.h.b16 %v429
    %v1135 = vunpack.c.l.b16 %v430
    %v1136 = vunpack.c.l.b16 %v431
    %v1137 = vunpack.c.h.b16 %v431
    %v1138 = vunpack.c.l.b16 %v432
    %v1139 = vunpack.c.h.b16 %v432
    %v1140 = vunpack.c.l.b16 %v433
    %v1141 = vunpack.c.l.b16 %v434
    %v1142 = vunpack.c.h.b16 %v434
    %v1143 = vunpack.c.l.b16 %v435
    %v1144 = vunpack.c.h.b16 %v435
    %v1145 = vunpack.c.l.b16 %v436
    %v1146 = vunpack.c.l.b16 %v437
    %v1147 = vunpack.c.h.b16 %v437
    %v1148 = vunpack.c.l.b16 %v438
    %v1149 = vunpack.c.h.b16 %v438
    %v1150 = vunpack.c.l.b16 %v439
    %v1151 = vunpack.c.l.b16 %v440
    %v1152 = vunpack.c.h.b16 %v440
    %v1153 = vunpack.c.l.b16 %v441
    %v1154 = vunpack.c.h.b16 %v441
    %v1155 = vunpack.c.l.b16 %v442
    %v1156 = vunpack.c.l.b16 %v443
    %v1157 = vunpack.c.h.b16 %v443
    %v1158 = vunpack.c.l.b16 %v444
    %v1159 = vunpack.c.h.b16 %v444
    %v1160 = vunpack.c.l.b16 %v445
    %v1161 = vunpack.c.l.b16 %v446
    %v1162 = vunpack.c.h.b16 %v446
    %v1163 = vunpack.c.l.b16 %v447
    %v1164 = vunpack.c.h.b16 %v447
    %v1165 = vunpack.c.l.b16 %v448
    %v1166 = vunpack.c.l.b16 %v449
    %v1167 = vunpack.c.h.b16 %v449
    %v1168 = vunpack.c.l.b16 %v450
    %v1169 = vunpack.c.h.b16 %v450
    %v1170 = vunpack.c.l.b16 %v451
    %v1171 = vunpack.c.l.b16 %v452
    %v1172 = vunpack.c.h.b16 %v452
    %v1173 = vunpack.c.l.b16 %v453
    %v1174 = vunpack.c.h.b16 %v453
    %v1175 = vunpack.c.l.b16 %v454
    %v1176 = vunpack.c.l.b16 %v455
    %v1177 = vunpack.c.h.b16 %v455
    %v1178 = vunpack.c.l.b16 %v456
    %v1179 = vunpack.c.h.b16 %v456
    %v1180 = vunpack.c.l.b16 %v457
    %v1181 = vunpack.c.l.b16 %v458
    %v1182 = vunpack.c.h.b16 %v458
    %v1183 = vunpack.c.l.b16 %v459
    %v1184 = vunpack.c.h.b16 %v459
    %v1185 = vunpack.c.l.b16 %v460
    %v1186 = vunpack.c.l.b16 %v461
    %v1187 = vunpack.c.h.b16 %v461
    %v1188 = vunpack.c.l.b16 %v462
    %v1189 = vunpack.c.h.b16 %v462
    %v1190 = vunpack.c.l.b16 %v463
    %v1191 = vunpack.c.l.b16 %v464
    %v1192 = vunpack.c.h.b16 %v464
    %v1193 = vunpack.c.l.b16 %v465
    %v1194 = vunpack.c.h.b16 %v465
    %v1195 = vunpack.c.l.b16 %v466
    %v1196 = vunpack.c.l.b16 %v467
    %v1197 = vunpack.c.h.b16 %v467
    %v1198 = vunpack.c.l.b16 %v468
    %v1199 = vunpack.c.h.b16 %v468
    %v1200 = vunpack.c.l.b16 %v469
    %v1201 = vunpack.c.l.b16 %v470
    %v1202 = vunpack.c.h.b16 %v470
    %v1203 = vunpack.c.l.b16 %v471
    %v1204 = vunpack.c.h.b16 %v471
    %v1205 = vunpack.c.l.b16 %v472
    %v1206 = vunpack.c.l.b16 %v473
    %v1207 = vunpack.c.h.b16 %v473
    %v1208 = vunpack.c.l.b16 %v474
    %v1209 = vunpack.c.h.b16 %v474
    %v1210 = vunpack.c.l.b16 %v475
    %v1211 = vunpack.c.l.b16 %v476
    %v1212 = vunpack.c.h.b16 %v476
    %v1213 = vunpack.c.l.b16 %v477
    %v1214 = vunpack.c.h.b16 %v477
    %v1215 = vunpack.c.l.b16 %v478
    %v1216 = vunpack.c.l.b16 %v479
    %v1217 = vunpack.c.h.b16 %v479
    %v1218 = vunpack.c.l.b16 %v480
    %v1219 = vunpack.c.h.b16 %v480
    %v1220 = vunpack.c.l.b16 %v481
    %v1221 = vunpack.c.l.b16 %v482
    %v1222 = vunpack.c.h.b16 %v482
    %v1223 = vunpack.c.l.b16 %v483
    %v1224 = vunpack.c.h.b16 %v483
    %v1225 = vunpack.c.l.b16 %v484
    %v1226 = vunpack.c.l.b16 %v485
    %v1227 = vunpack.c.h.b16 %v485
    %v1228 = vunpack.c.l.b16 %v486
    %v1229 = vunpack.c.h.b16 %v486
    %v1230 = vunpack.c.l.b16 %v487
    %v1231 = vunpack.c.l.b16 %v488
    %v1232 = vunpack.c.h.b16 %v488
    %v1233 = vunpack.c.l.b16 %v489
    %v1234 = vunpack.c.h.b16 %v489
    %v1235 = vunpack.c.l.b16 %v490
    %v1236 = vunpack.c.l.b16 %v491
    %v1237 = vunpack.c.h.b16 %v491
    %v1238 = vunpack.c.l.b16 %v492
    %v1239 = vunpack.c.h.b16 %v492
    %v1240 = vunpack.c.l.b16 %v493
    %v1241 = vunpack.c.l.b16 %v494
    %v1242 = vunpack.c.h.b16 %v494
    %v1243 = vunpack.c.l.b16 %v495
    %v1244 = vunpack.c.h.b16 %v495
    %v1245 = vunpack.c.l.b16 %v496
    %v1246 = vunpack.c.l.b16 %v497
    %v1247 = vunpack.c.h.b16 %v497
    %v1248 = vunpack.c.l.b16 %v498
    %v1249 = vunpack.c.h.b16 %v498
    %v1250 = vunpack.c.l.b16 %v499
    %v1251 = vunpack.c.l.b16 %v500
    %v1252 = vunpack.c.h.b16 %v500
    %v1253 = vunpack.c.l.b16 %v501
    %v1254 = vunpack.c.h.b16 %v501
    %v1255 = vunpack.c.l.b16 %v502
    %v1256 = vunpack.c.l.b16 %v503
    %v1257 = vunpack.c.h.b16 %v503
    %v1258 = vunpack.c.l.b16 %v504
    %v1259 = vunpack.c.h.b16 %v504
    %v1260 = vunpack.c.l.b16 %v505
    %v1261 = vunpack.c.l.b16 %v506
    %v1262 = vunpack.c.h.b16 %v506
    %v1263 = vunpack.c.l.b16 %v507
    %v1264 = vunpack.c.h.b16 %v507
    %v1265 = vunpack.c.l.b16 %v508
    %v1266 = vunpack.c.l.b16 %v509
    %v1267 = vunpack.c.h.b16 %v509
    %v1268 = vunpack.c.l.b16 %v510
    %v1269 = vunpack.c.h.b16 %v510
    %v1270 = vunpack.c.l.b16 %v511
    %v1271 = vunpack.c.l.b16 %v512
    %v1272 = vunpack.c.h.b16 %v512
    %v1273 = vunpack.c.l.b16 %v513
    %v1274 = vunpack.c.h.b16 %v513
    %v1275 = vunpack.c.l.b16 %v514
    %v1276 = vunpack.c.l.b16 %v515
    %v1277 = vunpack.c.h.b16 %v515
    %v1278 = vunpack.c.l.b16 %v516
    %v1279 = vunpack.c.h.b16 %v516
    %v1280 = vunpack.c.l.b16 %v517
    %v1281 = vunpack.c.l.b16 %v518
    %v1282 = vunpack.c.h.b16 %v518
    %v1283 = vunpack.c.l.b16 %v519
    %v1284 = vunpack.c.h.b16 %v519
    %v1285 = vunpack.c.l.b16 %v520
    %v1286 = vunpack.c.l.b16 %v521
    %v1287 = vunpack.c.h.b16 %v521
    %v1288 = vunpack.c.l.b16 %v522
    %v1289 = vunpack.c.h.b16 %v522
    %v1290 = vunpack.c.l.b16 %v523
    %v1291 = vunpack.c.l.b16 %v524
    %v1292 = vunpack.c.h.b16 %v524
    %v1293 = vunpack.c.l.b16 %v525
    %v1294 = vunpack.c.h.b16 %v525
    %v1295 = vunpack.c.l.b16 %v526
    %v1296 = vunpack.c.l.b16 %v527
    %v1297 = vunpack.c.h.b16 %v527
    %v1298 = vunpack.c.l.b16 %v528
    %v1299 = vunpack.c.h.b16 %v528
    %v1300 = vunpack.c.l.b16 %v529
    %v1301 = vunpack.c.l.b16 %v530
    %v1302 = vunpack.c.h.b16 %v530
    %v1303 = vunpack.c.l.b16 %v531
    %v1304 = vunpack.c.h.b16 %v531
    %v1305 = vunpack.c.l.b16 %v532
    %v1306 = vunpack.c.l.b16 %v533
    %v1307 = vunpack.c.h.b16 %v533
    %v1308 = vunpack.c.l.b16 %v534
    %v1309 = vunpack.c.h.b16 %v534
    %v1310 = vunpack.c.l.b16 %v535
    %v1311 = vunpack.c.l.b16 %v536
    %v1312 = vunpack.c.h.b16 %v536
    %v1313 = vunpack.c.l.b16 %v537
    %v1314 = vunpack.c.h.b16 %v537
    %v1315 = vunpack.c.l.b16 %v538
    %v1316 = vunpack.c.l.b16 %v539
    %v1317 = vunpack.c.h.b16 %v539
    %v1318 = vunpack.c.l.b16 %v540
    %v1319 = vunpack.c.h.b16 %v540
    %v1320 = vunpack.c.l.b16 %v541
    %v1321 = vunpack.c.l.b16 %v542
    %v1322 = vunpack.c.h.b16 %v542
    %v1323 = vunpack.c.l.b16 %v543
    %v1324 = vunpack.c.h.b16 %v543
    %v1325 = vunpack.c.l.b16 %v544
    %v1326 = vunpack.c.l.b16 %v545
    %v1327 = vunpack.c.h.b16 %v545
    %v1328 = vunpack.c.l.b16 %v546
    %v1329 = vunpack.c.h.b16 %v546
    %v1330 = vunpack.c.l.b16 %v547
    %v1331 = vunpack.c.l.b16 %v548
    %v1332 = vunpack.c.h.b16 %v548
    %v1333 = vunpack.c.l.b16 %v549
    %v1334 = vunpack.c.h.b16 %v549
    %v1335 = vunpack.c.l.b16 %v550
    %v1336 = vunpack.c.l.b16 %v551
    %v1337 = vunpack.c.h.b16 %v551
    %v1338 = vunpack.c.l.b16 %v552
    %v1339 = vunpack.c.h.b16 %v552
    %v1340 = vunpack.c.l.b16 %v553
    %v1341 = vunpack.c.l.b16 %v554
    %v1342 = vunpack.c.h.b16 %v554
    %v1343 = vunpack.c.l.b16 %v555
    %v1344 = vunpack.c.h.b16 %v555
    %v1345 = vunpack.c.l.b16 %v556
    %v1346 = vunpack.c.l.b16 %v557
    %v1347 = vunpack.c.h.b16 %v557
    %v1348 = vunpack.c.l.b16 %v558
    %v1349 = vunpack.c.h.b16 %v558
    %v1350 = vunpack.c.l.b16 %v559
    %v1351 = vunpack.c.l.b16 %v560
    %v1352 = vunpack.c.h.b16 %v560
    %v1353 = vunpack.c.l.b16 %v561
    %v1354 = vunpack.c.h.b16 %v561
    %v1355 = vunpack.c.l.b16 %v562
    %v1356 = vunpack.c.l.b16 %v563
    %v1357 = vunpack.c.h.b16 %v563
    %v1358 = vunpack.c.l.b16 %v564
    %v1359 = vunpack.c.h.b16 %v564
    %v1360 = vunpack.c.l.b16 %v565
    %v1361 = vunpack.c.l.b16 %v566
    %v1362 = vunpack.c.h.b16 %v566
    %v1363 = vunpack.c.l.b16 %v567
    %v1364 = vunpack.c.h.b16 %v567
    %v1365 = vunpack.c.l.b16 %v568
    %v1366 = vunpack.c.l.b16 %v569
    %v1367 = vunpack.c.h.b16 %v569
    %v1368 = vunpack.c.l.b16 %v570
    %v1369 = vunpack.c.h.b16 %v570
    %v1370 = vunpack.c.l.b16 %v571
    %v1371 = vunpack.c.l.b16 %v572
    %v1372 = vunpack.c.h.b16 %v572
    %v1373 = vunpack.c.l.b16 %v573
    %v1374 = vunpack.c.h.b16 %v573
    %v1375 = vunpack.c.l.b16 %v574
    %v1376 = vunpack.c.l.b16 %v575
    %v1377 = vunpack.c.h.b16 %v575
    %v1378 = vunpack.c.l.b16 %v576
    %v1379 = vunpack.c.h.b16 %v576
    %v1380 = vunpack.c.l.b16 %v577
    %v1381 = vunpack.c.l.b16 %v578
    %v1382 = vunpack.c.h.b16 %v578
    %v1383 = vunpack.c.l.b16 %v579
    %v1384 = vunpack.c.h.b16 %v579
    %v1385 = vunpack.c.l.b16 %v580
    %v1386 = vunpack.c.l.b16 %v581
    %v1387 = vunpack.c.h.b16 %v581
    %v1388 = vunpack.c.l.b16 %v582
    %v1389 = vunpack.c.h.b16 %v582
    %v1390 = vunpack.c.l.b16 %v583
    %v1391 = vunpack.c.l.b16 %v584
    %v1392 = vunpack.c.h.b16 %v584
    %v1393 = vunpack.c.l.b16 %v585
    %v1394 = vunpack.c.h.b16 %v585
    %v1395 = vunpack.c.l.b16 %v586
    %v1396 = vunpack.c.l.b16 %v587
    %v1397 = vunpack.c.h.b16 %v587
    %v1398 = vunpack.c.l.b16 %v588
    %v1399 = vunpack.c.h.b16 %v588
    %v1400 = vunpack.c.l.b16 %v589
    %v1401 = vunpack.c.l.b16 %v590
    %v1402 = vunpack.c.h.b16 %v590
    %v1403 = vunpack.c.l.b16 %v591
    %v1404 = vunpack.c.h.b16 %v591
    %v1405 = vunpack.c.l.b16 %v592
    %v1406 = vunpack.c.l.b16 %v593
    %v1407 = vunpack.c.h.b16 %v593
    %v1408 = vunpack.c.l.b16 %v594
    %v1409 = vunpack.c.h.b16 %v594
    %v1410 = vunpack.c.l.b16 %v595
    %v1411 = vunpack.c.l.b16 %v596
    %v1412 = vunpack.c.h.b16 %v596
    %v1413 = vunpack.c.l.b16 %v597
    %v1414 = vunpack.c.h.b16 %v597
    %v1415 = vunpack.c.l.b16 %v598
    %v1416 = vunpack.c.l.b16 %v599
    %v1417 = vunpack.c.h.b16 %v599
    %v1418 = vunpack.c.l.b16 %v600
    %v1419 = vunpack.c.h.b16 %v600
    %v1420 = vunpack.c.l.b16 %v601
    %v1421 = vunpack.c.l.b16 %v602
    %v1422 = vunpack.c.h.b16 %v602
    %v1423 = vunpack.c.l.b16 %v603
    %v1424 = vunpack.c.h.b16 %v603
    %v1425 = vunpack.c.l.b16 %v604
    %v1426 = vunpack.c.l.b16 %v605
    %v1427 = vunpack.c.h.b16 %v605
    %v1428 = vunpack.c.l.b16 %v606
    %v1429 = vunpack.c.h.b16 %v606
    %v1430 = vunpack.c.l.b16 %v607
    %v1431 = vunpack.c.l.b16 %v608
    %v1432 = vunpack.c.h.b16 %v608
    %v1433 = vunpack.c.l.b16 %v609
    %v1434 = vunpack.c.h.b16 %v609
    %v1435 = vunpack.c.l.b16 %v610
    %v1436 = vunpack.c.l.b16 %v611
    %v1437 = vunpack.c.h.b16 %v611
    %v1438 = vunpack.c.l.b16 %v612
    %v1439 = vunpack.c.h.b16 %v612
    %v1440 = vunpack.c.l.b16 %v613
    %v1441 = vunpack.c.l.b16 %v614
    %v1442 = vunpack.c.h.b16 %v614
    %v1443 = vunpack.c.l.b16 %v615
    %v1444 = vunpack.c.h.b16 %v615
    %v1445 = vunpack.c.l.b16 %v616
    %v1446 = vunpack.c.l.b16 %v617
    %v1447 = vunpack.c.h.b16 %v617
    %v1448 = vunpack.c.l.b16 %v618
    %v1449 = vunpack.c.h.b16 %v618
    %v1450 = vunpack.c.l.b16 %v619
    %v1451 = vunpack.c.l.b16 %v620
    %v1452 = vunpack.c.h.b16 %v620
    %v1453 = vunpack.c.l.b16 %v621
    %v1454 = vunpack.c.h.b16 %v621
    %v1455 = vunpack.c.l.b16 %v622
    %v1456 = vunpack.c.l.b16 %v623
    %v1457 = vunpack.c.h.b16 %v623
    %v1458 = vunpack.c.l.b16 %v624
    %v1459 = vunpack.c.h.b16 %v624
    %v1460 = vunpack.c.l.b16 %v625
    %v1461 = vunpack.c.l.b16 %v626
    %v1462 = vunpack.c.h.b16 %v626
    %v1463 = vunpack.c.l.b16 %v627
    %v1464 = vunpack.c.h.b16 %v627
    %v1465 = vunpack.c.l.b16 %v628
    %v1466 = vunpack.c.l.b16 %v629
    %v1467 = vunpack.c.h.b16 %v629
    %v1468 = vunpack.c.l.b16 %v630
    %v1469 = vunpack.c.h.b16 %v630
    %v1470 = vunpack.c.l.b16 %v631
    %v1471 = vunpack.c.l.b16 %v632
    %v1472 = vunpack.c.h.b16 %v632
    %v1473 = vunpack.c.l.b16 %v633
    %v1474 = vunpack.c.h.b16 %v633
    %v1475 = vunpack.c.l.b16 %v634
    %v1476 = vunpack.c.l.b16 %v635
    %v1477 = vunpack.c.h.b16 %v635
    %v1478 = vunpack.c.l.b16 %v636
    %v1479 = vunpack.c.h.b16 %v636
    %v1480 = vunpack.c.l.b16 %v637
    %v1481 = vunpack.c.l.b16 %v638
    %v1482 = vunpack.c.h.b16 %v638
    %v1483 = vunpack.c.l.b16 %v639
    %v1484 = vunpack.c.h.b16 %v639
    %v1485 = vunpack.c.l.b16 %v640
    %v1486 = vunpack.c.l.b16 %v641
    %v1487 = vunpack.c.h.b16 %v641
    %v1488 = vunpack.c.l.b16 %v642
    %v1489 = vunpack.c.h.b16 %v642
    %v1490 = vunpack.c.l.b16 %v643
    %v1491 = vunpack.c.l.b16 %v644
    %v1492 = vunpack.c.h.b16 %v644
    %v1493 = vunpack.c.l.b16 %v645
    %v1494 = vunpack.c.h.b16 %v645
    %v1495 = vunpack.c.l.b16 %v646
    %v1496 = vunpack.c.l.b16 %v647
    %v1497 = vunpack.c.h.b16 %v647
    %v1498 = vunpack.c.l.b16 %v648
    %v1499 = vunpack.c.h.b16 %v648
    %v1500 = vunpack.c.l.b16 %v649
    %v1501 = vunpack.c.l.b16 %v650
    %v1502 = vunpack.c.h.b16 %v650
    %v1503 = vunpack.c.l.b16 %v651
    %v1504 = vunpack.c.h.b16 %v651
    %v1505 = vunpack.c.l.b16 %v652
    %v1506 = vunpack.c.l.b16 %v653
    %v1507 = vunpack.c.h.b16 %v653
    %v1508 = vunpack.c.l.b16 %v654
    %v1509 = vunpack.c.h.b16 %v654
    %v1510 = vunpack.c.l.b16 %v655
    %v1511 = vunpack.c.l.b16 %v656
    %v1512 = vunpack.c.h.b16 %v656
    %v1513 = vunpack.c.l.b16 %v657
    %v1514 = vunpack.c.h.b16 %v657
    %v1515 = vunpack.c.l.b16 %v658
    %v1516 = vunpack.c.l.b16 %v659
    %v1517 = vunpack.c.h.b16 %v659
    %v1518 = vunpack.c.l.b16 %v660
    %v1519 = vunpack.c.h.b16 %v660
    %v1520 = vunpack.c.l.b16 %v661
    %v1521 = vunpack.c.l.b16 %v662
    %v1522 = vunpack.c.h.b16 %v662
    %v1523 = vunpack.c.l.b16 %v663
    %v1524 = vunpack.c.h.b16 %v663
    %v1525 = vunpack.c.l.b16 %v664
    %v1526 = vunpack.c.l.b16 %v665
    %v1527 = vunpack.c.h.b16 %v665
    %v1528 = vunpack.c.l.b16 %v666
    %v1529 = vunpack.c.h.b16 %v666
    %v1530 = vunpack.c.l.b16 %v667
    %v1531 = vunpack.c.l.b16 %v668
    %v1532 = vunpack.c.h.b16 %v668
    %v1533 = vunpack.c.l.b16 %v669
    %v1534 = vunpack.c.h.b16 %v669
    %v1535 = vunpack.c.l.b16 %v670
    %v1536 = vunpack.c.l.b16 %v671
    %v1537 = vunpack.c.h.b16 %v671
    %v1538 = vunpack.c.l.b16 %v672
    %v1539 = vunpack.c.h.b16 %v672
    %v1540 = vunpack.c.l.b16 %v673
    %v1541 = vunpack.c.l.b16 %v674
    %v1542 = vunpack.c.h.b16 %v674
    %v1543 = vunpack.c.l.b16 %v675
    %v1544 = vunpack.c.h.b16 %v675
    %v1545 = vunpack.c.l.b16 %v676
    %v1546 = vunpack.c.l.b16 %v677
    %v1547 = vunpack.c.h.b16 %v677
    %v1548 = vunpack.c.l.b16 %v678
    %v1549 = vunpack.c.h.b16 %v678
    %v1550 = vunpack.c.l.b16 %v679
    %v1551 = vunpack.c.l.b16 %v680
    %v1552 = vunpack.c.h.b16 %v680
    %v1553 = vunpack.c.l.b16 %v681
    %v1554 = vunpack.c.h.b16 %v681
    %v1555 = vunpack.c.l.b16 %v682
    %v1556 = vunpack.c.l.b16 %v683
    %v1557 = vunpack.c.h.b16 %v683
    %v1558 = vunpack.c.l.b16 %v684
    %v1559 = vunpack.c.h.b16 %v684
    %v1560 = vunpack.c.l.b16 %v685
    %v1561 = vunpack.c.l.b16 %v686
    %v1562 = vunpack.c.h.b16 %v686
    %v1563 = vunpack.c.l.b16 %v687
    %v1564 = vunpack.c.h.b16 %v687
    %v1565 = vunpack.c.l.b16 %v688
    %v1566 = vunpack.c.l.b16 %v689
    %v1567 = vunpack.c.h.b16 %v689
    %v1568 = vunpack.c.l.b16 %v690
    %v1569 = vunpack.c.h.b16 %v690
    %v1570 = vunpack.c.l.b16 %v691
    %v1571 = vunpack.c.l.b16 %v692
    %v1572 = vunpack.c.h.b16 %v692
    %v1573 = vunpack.c.l.b16 %v693
    %v1574 = vunpack.c.h.b16 %v693
    %v1575 = vunpack.c.l.b16 %v694
    %v1576 = vunpack.c.l.b16 %v695
    %v1577 = vunpack.c.h.b16 %v695
    %v1578 = vunpack.c.l.b16 %v696
    %v1579 = vunpack.c.h.b16 %v696
    %v1580 = vunpack.c.l.b16 %v697
    %v1581 = vunpack.c.l.b16 %v698
    %v1582 = vunpack.c.h.b16 %v698
    %v1583 = vunpack.c.l.b16 %v699
    %v1584 = vunpack.c.h.b16 %v699
    %v1585 = vunpack.c.l.b16 %v700
    %v1586 = vunpack.c.l.b16 %v701
    %v1587 = vunpack.c.h.b16 %v701
    %v1588 = vunpack.c.l.b16 %v702
    %v1589 = vunpack.c.h.b16 %v702
    %v1590 = vunpack.c.l.b16 %v703
    %v1591 = vunpack.c.l.b16 %v704
    %v1592 = vunpack.c.h.b16 %v704
    %v1593 = vunpack.c.l.b16 %v705
    %v1594 = vunpack.c.h.b16 %v705
    %v1595 = vunpack.c.l.b16 %v706
    %v1596 = vunpack.c.l.b16 %v707
    %v1597 = vunpack.c.h.b16 %v707
    %v1598 = vunpack.c.l.b16 %v708
    %v1599 = vunpack.c.h.b16 %v708
    %v1600 = vunpack.c.l.b16 %v709
    %v1601 = vunpack.c.l.b16 %v710
    %v1602 = vunpack.c.h.b16 %v710
    %v1603 = vunpack.c.l.b16 %v711
    %v1604 = vunpack.c.h.b16 %v711
    %v1605 = vunpack.c.l.b16 %v712
    %v1606 = vunpack.c.l.b16 %v713
    %v1607 = vunpack.c.h.b16 %v713
    %v1608 = vunpack.c.l.b16 %v714
    %v1609 = vunpack.c.h.b16 %v714
    %v1610 = vunpack.c.l.b16 %v715
    %v1611 = vunpack.c.l.b16 %v716
    %v1612 = vunpack.c.h.b16 %v716
    %v1613 = vunpack.c.l.b16 %v717
    %v1614 = vunpack.c.h.b16 %v717
    %v1615 = vunpack.c.l.b16 %v718
    %v1616 = vunpack.c.l.b16 %v719
    %v1617 = vunpack.c.h.b16 %v719
    %v1618 = vunpack.c.l.b16 %v720
    %v1619 = vunpack.c.h.b16 %v720
    %v1620 = vunpack.c.l.b16 %v721
    %v1621 = vunpack.c.l.b16 %v722
    %v1622 = vunpack.c.h.b16 %v722
    %v1623 = vunpack.c.l.b16 %v723
    %v1624 = vunpack.c.h.b16 %v723
    %v1625 = vunpack.c.l.b16 %v724
    %v1626 = vunpack.c.l.b16 %v725
    %v1627 = vunpack.c.h.b16 %v725
    %v1628 = vunpack.c.l.b16 %v726
    %v1629 = vunpack.c.h.b16 %v726
    %v1630 = vunpack.c.l.b16 %v727
    %v1631 = vunpack.c.l.b16 %v728
    %v1632 = vunpack.c.h.b16 %v728
    %v1633 = vunpack.c.l.b16 %v729
    %v1634 = vunpack.c.h.b16 %v729
    %v1635 = vunpack.c.l.b16 %v730
    %v1636 = vunpack.c.l.b16 %v731
    %v1637 = vunpack.c.h.b16 %v731
    %v1638 = vunpack.c.l.b16 %v732
    %v1639 = vunpack.c.h.b16 %v732
    %v1640 = vunpack.c.l.b16 %v733
    %v1641 = vunpack.c.l.b16 %v734
    %v1642 = vunpack.c.h.b16 %v734
    %v1643 = vunpack.c.l.b16 %v735
    %v1644 = vunpack.c.h.b16 %v735
    %v1645 = vunpack.c.l.b16 %v736
    %v1646 = vunpack.c.l.b16 %v737
    %v1647 = vunpack.c.h.b16 %v737
    %v1648 = vunpack.c.l.b16 %v738
    %v1649 = vunpack.c.h.b16 %v738
    %v1650 = vunpack.c.l.b16 %v739
    %v1651 = vunpack.c.l.b16 %v740
    %v1652 = vunpack.c.h.b16 %v740
    %v1653 = vunpack.c.l.b16 %v741
    %v1654 = vunpack.c.h.b16 %v741
    %v1655 = vunpack.c.l.b16 %v742
    %v1656 = vunpack.c.l.b16 %v743
    %v1657 = vunpack.c.h.b16 %v743
    %v1658 = vunpack.c.l.b16 %v744
    %v1659 = vunpack.c.h.b16 %v744
    %v1660 = vunpack.c.l.b16 %v745
    %v1661 = vunpack.c.l.b16 %v746
    %v1662 = vunpack.c.h.b16 %v746
    %v1663 = vunpack.c.l.b16 %v747
    %v1664 = vunpack.c.h.b16 %v747
    %v1665 = vunpack.c.l.b16 %v748
    %v1666 = vunpack.c.l.b16 %v749
    %v1667 = vunpack.c.h.b16 %v749
    %v1668 = vunpack.c.l.b16 %v750
    %v1669 = vunpack.c.h.b16 %v750
    %v1670 = vunpack.c.l.b16 %v751
    %v1671 = vunpack.c.l.b16 %v752
    %v1672 = vunpack.c.h.b16 %v752
    %v1673 = vunpack.c.l.b16 %v753
    %v1674 = vunpack.c.h.b16 %v753
    %v1675 = vunpack.c.l.b16 %v754
    %v1676 = vunpack.c.l.b16 %v755
    %v1677 = vunpack.c.h.b16 %v755
    %v1678 = vunpack.c.l.b16 %v756
    %v1679 = vunpack.c.h.b16 %v756
    %v1680 = vunpack.c.l.b16 %v757
    %v1681 = vpack.c.b16 %v1126, %v1121
    %v1682 = vpack.c.b16 %v1127, %v1122
    %v1683 = vpack.c.b16 %v1128, %v1123
    %v1684 = vpack.c.b16 %v1129, %v1124
    %v1685 = vpack.c.b16 %v1130, %v1125
    %v1686 = vpack.c.b16 %v1136, %v1131
    %v1687 = vpack.c.b16 %v1137, %v1132
    %v1688 = vpack.c.b16 %v1138, %v1133
    %v1689 = vpack.c.b16 %v1139, %v1134
    %v1690 = vpack.c.b16 %v1140, %v1135
    %v1691 = vpack.c.b16 %v1146, %v1141
    %v1692 = vpack.c.b16 %v1147, %v1142
    %v1693 = vpack.c.b16 %v1148, %v1143
    %v1694 = vpack.c.b16 %v1149, %v1144
    %v1695 = vpack.c.b16 %v1150, %v1145
    %v1696 = vpack.c.b16 %v1156, %v1151
    %v1697 = vpack.c.b16 %v1157, %v1152
    %v1698 = vpack.c.b16 %v1158, %v1153
    %v1699 = vpack.c.b16 %v1159, %v1154
    %v1700 = vpack.c.b16 %v1160, %v1155
    %v1701 = vpack.c.b16 %v1166, %v1161
    %v1702 = vpack.c.b16 %v1167, %v1162
    %v1703 = vpack.c.b16 %v1168, %v1163
    %v1704 = vpack.c.b16 %v1169, %v1164
    %v1705 = vpack.c.b16 %v1170, %v1165
    %v1706 = vpack.c.b16 %v1176, %v1171
    %v1707 = vpack.c.b16 %v1177, %v1172
    %v1708 = vpack.c.b16 %v1178, %v1173
    %v1709 = vpack.c.b16 %v1179, %v1174
    %v1710 = vpack.c.b16 %v1180, %v1175
    %v1711 = vpack.c.b16 %v1186, %v1181
    %v1712 = vpack.c.b16 %v1187, %v1182
    %v1713 = vpack.c.b16 %v1188, %v1183
    %v1714 = vpack.c.b16 %v1189, %v1184
    %v1715 = vpack.c.b16 %v1190, %v1185
    %v1716 = vpack.c.b16 %v1196, %v1191
    %v1717 = vpack.c.b16 %v1197, %v1192
    %v1718 = vpack.c.b16 %v1198, %v1193
    %v1719 = vpack.c.b16 %v1199, %v1194
    %v1720 = vpack.c.b16 %v1200, %v1195
    %v1721 = vpack.c.b16 %v1206, %v1201
    %v1722 = vpack.c.b16 %v1207, %v1202
    %v1723 = vpack.c.b16 %v1208, %v1203
    %v1724 = vpack.c.b16 %v1209, %v1204
    %v1725 = vpack.c.b16 %v1210, %v1205
    %v1726 = vpack.c.b16 %v1216, %v1211
    %v1727 = vpack.c.b16 %v1217, %v1212
    %v1728 = vpack.c.b16 %v1218, %v1213
    %v1729 = vpack.c.b16 %v1219, %v1214
    %v1730 = vpack.c.b16 %v1220, %v1215
    %v1731 = vpack.c.b16 %v1226, %v1221
    %v1732 = vpack.c.b16 %v1227, %v1222
    %v1733 = vpack.c.b16 %v1228, %v1223
    %v1734 = vpack.c.b16 %v1229, %v1224
    %v1735 = vpack.c.b16 %v1230, %v1225
    %v1736 = vpack.c.b16 %v1236, %v1231
    %v1737 = vpack.c.b16 %v1237, %v1232
    %v1738 = vpack.c.b16 %v1238, %v1233
    %v1739 = vpack.c.b16 %v1239, %v1234
    %v1740 = vpack.c.b16 %v1240, %v1235
    %v1741 = vpack.c.b16 %v1246, %v1241
    %v1742 = vpack.c.b16 %v1247, %v1242
    %v1743 = vpack.c.b16 %v1248, %v1243
    %v1744 = vpack.c.b16 %v1249, %v1244
    %v1745 = vpack.c.b16 %v1250, %v1245
    %v1746 = vpack.c.b16 %v1256, %v1251
    %v1747 = vpack.c.b16 %v1257, %v1252
    %v1748 = vpack.c.b16 %v1258, %v1253
    %v1749 = vpack.c.b16 %v1259, %v1254
    %v1750 = vpack.c.b16 %v1260, %v1255
    %v1751 = vpack.c.b16 %v1266, %v1261
    %v1752 = vpack.c.b16 %v1267, %v1262
    %v1753 = vpack.c.b16 %v1268, %v1263
    %v1754 = vpack.c.b16 %v1269, %v1264
    %v1755 = vpack.c.b16 %v1270, %v1265
    %v1756 = vpack.c.b16 %v1276, %v1271
    %v1757 = vpack.c.b16 %v1277, %v1272
    %v1758 = vpack.c.b16 %v1278, %v1273
    %v1759 = vpack.c.b16 %v1279, %v1274
    %v1760 = vpack.c.b16 %v1280, %v1275
    %v1761 = vpack.c.b16 %v1286, %v1281
    %v1762 = vpack.c.b16 %v1287, %v1282
    %v1763 = vpack.c.b16 %v1288, %v1283
    %v1764 = vpack.c.b16 %v1289, %v1284
    %v1765 = vpack.c.b16 %v1290, %v1285
    %v1766 = vpack.c.b16 %v1296, %v1291
    %v1767 = vpack.c.b16 %v1297, %v1292
    %v1768 = vpack.c.b16 %v1298, %v1293
    %v1769 = vpack.c.b16 %v1299, %v1294
    %v1770 = vpack.c.b16 %v1300, %v1295
    %v1771 = vpack.c.b16 %v1306, %v1301
    %v1772 = vpack.c.b16 %v1307, %v1302
    %v1773 = vpack.c.b16 %v1308, %v1303
    %v1774 = vpack.c.b16 %v1309, %v1304
    %v1775 = vpack.c.b16 %v1310, %v1305
    %v1776 = vpack.c.b16 %v1316, %v1311
    %v1777 = vpack.c.b16 %v1317, %v1312
    %v1778 = vpack.c.b16 %v1318, %v1313
    %v1779 = vpack.c.b16 %v1319, %v1314
    %v1780 = vpack.c.b16 %v1320, %v1315
    %v1781 = vpack.c.b16 %v1326, %v1321
    %v1782 = vpack.c.b16 %v1327, %v1322
    %v1783 = vpack.c.b16 %v1328, %v1323
    %v1784 = vpack.c.b16 %v1329, %v1324
    %v1785 = vpack.c.b16 %v1330, %v1325
    %v1786 = vpack.c.b16 %v1336, %v1331
    %v1787 = vpack.c.b16 %v1337, %v1332
    %v1788 = vpack.c.b16 %v1338, %v1333
    %v1789 = vpack.c.b16 %v1339, %v1334
    %v1790 = vpack.c.b16 %v1340, %v1335
    %v1791 = vpack.c.b16 %v1346, %v1341
    %v1792 = vpack.c.b16 %v1347, %v1342
    %v1793 = vpack.c.b16 %v1348, %v1343
    %v1794 = vpack.c.b16 %v1349, %v1344
    %v1795 = vpack.c.b16 %v1350, %v1345
    %v1796 = vpack.c.b16 %v1356, %v1351
    %v1797 = vpack.c.b16 %v1357, %v1352
    %v1798 = vpack.c.b16 %v1358, %v1353
    %v1799 = vpack.c.b16 %v1359, %v1354
    %v1800 = vpack.c.b16 %v1360, %v1355
    %v1801 = vpack.c.b16 %v1366, %v1361
    %v1802 = vpack.c.b16 %v1367, %v1362
    %v1803 = vpack.c.b16 %v1368, %v1363
    %v1804 = vpack.c.b16 %v1369, %v1364
    %v1805 = vpack.c.b16 %v1370, %v1365
    %v1806 = vpack.c.b16 %v1376, %v1371
    %v1807 = vpack.c.b16 %v1377, %v1372
    %v1808 = vpack.c.b16 %v1378, %v1373
    %v1809 = vpack.c.b16 %v1379, %v1374
    %v1810 = vpack.c.b16 %v1380, %v1375
    %v1811 = vpack.c.b16 %v1386, %v1381
    %v1812 = vpack.c.b16 %v1387, %v1382
    %v1813 = vpack.c.b16 %v1388, %v1383
    %v1814 = vpack.c.b16 %v1389, %v1384
    %v1815 = vpack.c.b16 %v1390, %v1385
    %v1816 = vpack.c.b16 %v1396, %v1391
    %v1817 = vpack.c.b16 %v1397, %v1392
    %v1818 = vpack.c.b16 %v1398, %v1393
    %v1819 = vpack.c.b16 %v1399, %v1394
    %v1820 = vpack.c.b16 %v1400, %v1395
    %v1821 = vpack.c.b16 %v1406, %v1401
    %v1822 = vpack.c.b16 %v1407, %v1402
    %v1823 = vpack.c.b16 %v1408, %v1403
    %v1824 = vpack.c.b16 %v1409, %v1404
    %v1825 = vpack.c.b16 %v1410, %v1405
    %v1826 = vpack.c.b16 %v1416, %v1411
    %v1827 = vpack.c.b16 %v1417, %v1412
    %v1828 = vpack.c.b16 %v1418, %v1413
    %v1829 = vpack.c.b16 %v1419, %v1414
    %v1830 = vpack.c.b16 %v1420, %v1415
    %v1831 = vpack.c.b16 %v1426, %v1421
    %v1832 = vpack.c.b16 %v1427, %v1422
    %v1833 = vpack.c.b16 %v1428, %v1423
    %v1834 = vpack.c.b16 %v1429, %v1424
    %v1835 = vpack.c.b16 %v1430, %v1425
    %v1836 = vpack.c.b16 %v1436, %v1431
    %v1837 = vpack.c.b16 %v1437, %v1432
    %v1838 = vpack.c.b16 %v1438, %v1433
    %v1839 = vpack.c.b16 %v1439, %v1434
    %v1840 = vpack.c.b16 %v1440, %v1435
    %v1841 = vpack.c.b16 %v1446, %v1441
    %v1842 = vpack.c.b16 %v1447, %v1442
    %v1843 = vpack.c.b16 %v1448, %v1443
    %v1844 = vpack.c.b16 %v1449, %v1444
    %v1845 = vpack.c.b16 %v1450, %v1445
    %v1846 = vpack.c.b16 %v1456, %v1451
    %v1847 = vpack.c.b16 %v1457, %v1452
    %v1848 = vpack.c.b16 %v1458, %v1453
    %v1849 = vpack.c.b16 %v1459, %v1454
    %v1850 = vpack.c.b16 %v1460, %v1455
    %v1851 = vpack.c.b16 %v1466, %v1461
    %v1852 = vpack.c.b16 %v1467, %v1462
    %v1853 = vpack.c.b16 %v1468, %v1463
    %v1854 = vpack.c.b16 %v1469, %v1464
    %v1855 = vpack.c.b16 %v1470, %v1465
    %v1856 = vpack.c.b16 %v1476, %v1471
    %v1857 = vpack.c.b16 %v1477, %v1472
    %v1858 = vpack.c.b16 %v1478, %v1473
    %v1859 = vpack.c.b16 %v1479, %v1474
    %v1860 = vpack.c.b16 %v1480, %v1475
    %v1861 = vpack.c.b16 %v1486, %v1481
    %v1862 = vpack.c.b16 %v1487, %v1482
    %v1863 = vpack.c.b16 %v1488, %v1483
    %v1864 = vpack.c.b16 %v1489, %v1484
    %v1865 = vpack.c.b16 %v1490, %v1485
    %v1866 = vpack.c.b16 %v1496, %v1491
    %v1867 = vpack.c.b16 %v1497, %v1492
    %v1868 = vpack.c.b16 %v1498, %v1493
    %v1869 = vpack.c.b16 %v1499, %v1494
    %v1870 = vpack.c.b16 %v1500, %v1495
    %v1871 = vpack.c.b16 %v1506, %v1501
    %v1872 = vpack.c.b16 %v1507, %v1502
    %v1873 = vpack.c.b16 %v1508, %v1503
    %v1874 = vpack.c.b16 %v1509, %v1504
    %v1875 = vpack.c.b16 %v1510, %v1505
    %v1876 = vpack.c.b16 %v1516, %v1511
    %v1877 = vpack.c.b16 %v1517, %v1512
    %v1878 = vpack.c.b16 %v1518, %v1513
    %v1879 = vpack.c.b16 %v1519, %v1514
    %v1880 = vpack.c.b16 %v1520, %v1515
    %v1881 = vpack.c.b16 %v1526, %v1521
    %v1882 = vpack.c.b16 %v1527, %v1522
    %v1883 = vpack.c.b16 %v1528, %v1523
    %v1884 = vpack.c.b16 %v1529, %v1524
    %v1885 = vpack.c.b16 %v1530, %v1525
    %v1886 = vpack.c.b16 %v1536, %v1531
    %v1887 = vpack.c.b16 %v1537, %v1532
    %v1888 = vpack.c.b16 %v1538, %v1533
    %v1889 = vpack.c.b16 %v1539, %v1534
    %v1890 = vpack.c.b16 %v1540, %v1535
    %v1891 = vpack.c.b16 %v1546, %v1541
    %v1892 = vpack.c.b16 %v1547, %v1542
    %v1893 = vpack.c.b16 %v1548, %v1543
    %v1894 = vpack.c.b16 %v1549, %v1544
    %v1895 = vpack.c.b16 %v1550, %v1545
    %v1896 = vpack.c.b16 %v1556, %v1551
    %v1897 = vpack.c.b16 %v1557, %v1552
    %v1898 = vpack.c.b16 %v1558, %v1553
    %v1899 = vpack.c.b16 %v1559, %v1554
    %v1900 = vpack.c.b16 %v1560, %v1555
    %v1901 = vpack.c.b16 %v1566, %v1561
    %v1902 = vpack.c.b16 %v1567, %v1562
    %v1903 = vpack.c.b16 %v1568, %v1563
    %v1904 = vpack.c.b16 %v1569, %v1564
    %v1905 = vpack.c.b16 %v1570, %v1565
    %v1906 = vpack.c.b16 %v1576, %v1571
    %v1907 = vpack.c.b16 %v1577, %v1572
    %v1908 = vpack.c.b16 %v1578, %v1573
    %v1909 = vpack.c.b16 %v1579, %v1574
    %v1910 = vpack.c.b16 %v1580, %v1575
    %v1911 = vpack.c.b16 %v1586, %v1581
    %v1912 = vpack.c.b16 %v1587, %v1582
    %v1913 = vpack.c.b16 %v1588, %v1583
    %v1914 = vpack.c.b16 %v1589, %v1584
    %v1915 = vpack.c.b16 %v1590, %v1585
    %v1916 = vpack.c.b16 %v1596, %v1591
    %v1917 = vpack.c.b16 %v1597, %v1592
    %v1918 = vpack.c.b16 %v1598, %v1593
    %v1919 = vpack.c.b16 %v1599, %v1594
    %v1920 = vpack.c.b16 %v1600, %v1595
    %v1921 = vpack.c.b16 %v1606, %v1601
    %v1922 = vpack.c.b16 %v1607, %v1602
    %v1923 = vpack.c.b16 %v1608, %v1603
    %v1924 = vpack.c.b16 %v1609, %v1604
    %v1925 = vpack.c.b16 %v1610, %v1605
    %v1926 = vpack.c.b16 %v1616, %v1611
    %v1927 = vpack.c.b16 %v1617, %v1612
    %v1928 = vpack.c.b16 %v1618, %v1613
    %v1929 = vpack.c.b16 %v1619, %v1614
    %v1930 = vpack.c.b16 %v1620, %v1615
    %v1931 = vpack.c.b16 %v1626, %v1621
    %v1932 = vpack.c.b16 %v1627, %v1622
    %v1933 = vpack.c.b16 %v1628, %v1623
    %v1934 = vpack.c.b16 %v1629, %v1624
    %v1935 = vpack.c.b16 %v1630, %v1625
    %v1936 = vpack.c.b16 %v1636, %v1631
    %v1937 = vpack.c.b16 %v1637, %v1632
    %v1938 = vpack.c.b16 %v1638, %v1633
    %v1939 = vpack.c.b16 %v1639, %v1634
    %v1940 = vpack.c.b16 %v1640, %v1635
    %v1941 = vpack.c.b16 %v1646, %v1641
    %v1942 = vpack.c.b16 %v1647, %v1642
    %v1943 = vpack.c.b16 %v1648, %v1643
    %v1944 = vpack.c.b16 %v1649, %v1644
    %v1945 = vpack.c.b16 %v1650, %v1645
    %v1946 = vpack.c.b16 %v1656, %v1651
    %v1947 = vpack.c.b16 %v1657, %v1652
    %v1948 = vpack.c.b16 %v1658, %v1653
    %v1949 = vpack.c.b16 %v1659, %v1654
    %v1950 = vpack.c.b16 %v1660, %v1655
    %v1951 = vpack.c.b16 %v1666, %v1661
    %v1952 = vpack.c.b16 %v1667, %v1662
    %v1953 = vpack.c.b16 %v1668, %v1663
    %v1954 = vpack.c.b16 %v1669, %v1664
    %v1955 = vpack.c.b16 %v1670, %v1665
    %v1956 = vpack.c.b16 %v1676, %v1671
    %v1957 = vpack.c.b16 %v1677, %v1672
    %v1958 = vpack.c.b16 %v1678, %v1673
    %v1959 = vpack.c.b16 %v1679, %v1674
    %v1960 = vpack.c.b16 %v1680, %v1675
    %2241 = vmatprep.subr.bf16.mxu0 %v1682
    %2242 = vmatpush1.bf16.msra.mxu0 %v1681
    %2243 = vmatprep.subr.bf16.mxu0 %v1687
    %2244 = vmatpush1.bf16.msra.mxu0 %v1686
    %2245 = vmatprep.subr.bf16.mxu0 %v1692
    %2246 = vmatpush1.bf16.msra.mxu0 %v1691
    %2247 = vmatprep.subr.bf16.mxu0 %v1697
    %2248 = vmatpush1.bf16.msra.mxu0 %v1696
    %2249 = vmatprep.subr.bf16.mxu0 %v1702
    %2250 = vmatpush1.bf16.msra.mxu0 %v1701
    %2251 = vmatprep.subr.bf16.mxu0 %v1707
    %2252 = vmatpush1.bf16.msra.mxu0 %v1706
    %2253 = vmatprep.subr.bf16.mxu0 %v1712
    %2254 = vmatpush1.bf16.msra.mxu0 %v1711
    %2255 = vmatprep.subr.bf16.mxu0 %v1717
    %2256 = vmatpush1.bf16.msra.mxu0 %v1716
    %2257 = vmatprep.subr.bf16.mxu0 %v1722
    %2258 = vmatpush1.bf16.msra.mxu0 %v1721
    %2259 = vmatprep.subr.bf16.mxu0 %v1727
    %2260 = vmatpush1.bf16.msra.mxu0 %v1726
    %2261 = vmatprep.subr.bf16.mxu0 %v1732
    %2262 = vmatpush1.bf16.msra.mxu0 %v1731
    %2263 = vmatprep.subr.bf16.mxu0 %v1737
    %2264 = vmatpush1.bf16.msra.mxu0 %v1736
    %2265 = vmatprep.subr.bf16.mxu0 %v1742
    %2266 = vmatpush1.bf16.msra.mxu0 %v1741
    %2267 = vmatprep.subr.bf16.mxu0 %v1747
    %2268 = vmatpush1.bf16.msra.mxu0 %v1746
    %2269 = vmatprep.subr.bf16.mxu0 %v1752
    %2270 = vmatpush1.bf16.msra.mxu0 %v1751
    %2271 = vmatprep.subr.bf16.mxu0 %v1757
    %2272 = vmatpush1.bf16.msra.mxu0 %v1756
    %2273 = vmatprep.mubr.bf16.mxu0 %v416
    %2274 = vmatmul.mubr.bf16.gmra.mrb[0].mxu0 %v415
    %v2275 = vpop.f32.mrb[0].mxu0
    %v2276 = vadd.f32 %v763, %v2275
    %v2277 = vpop.f32.mrb[0].mxu0
    %v2278 = vadd.f32 %v767, %v2277
    %v2279 = vpop.f32.mrb[0].mxu0
    %v2280 = vpop.f32.mrb[0].mxu0
    %2281 = vdwg.mxu0
    %2282 = vmatprep.subr.bf16.mxu0 %v1762
    %2283 = vmatpush1.bf16.msra.mxu0 %v1761
    %2284 = vmatprep.subr.bf16.mxu0 %v1767
    %2285 = vmatpush1.bf16.msra.mxu0 %v1766
    %2286 = vmatprep.subr.bf16.mxu0 %v1772
    %2287 = vmatpush1.bf16.msra.mxu0 %v1771
    %2288 = vmatprep.subr.bf16.mxu0 %v1777
    %2289 = vmatpush1.bf16.msra.mxu0 %v1776
    %2290 = vmatprep.subr.bf16.mxu0 %v1782
    %2291 = vmatpush1.bf16.msra.mxu0 %v1781
    %2292 = vmatprep.subr.bf16.mxu0 %v1787
    %2293 = vmatpush1.bf16.msra.mxu0 %v1786
    %2294 = vmatprep.subr.bf16.mxu0 %v1792
    %2295 = vmatpush1.bf16.msra.mxu0 %v1791
    %2296 = vmatprep.subr.bf16.mxu0 %v1797
    %2297 = vmatpush1.bf16.msra.mxu0 %v1796
    %2298 = vmatprep.subr.bf16.mxu0 %v1802
    %2299 = vmatpush1.bf16.msra.mxu0 %v1801
    %2300 = vmatprep.subr.bf16.mxu0 %v1807
    %2301 = vmatpush1.bf16.msra.mxu0 %v1806
    %2302 = vmatprep.subr.bf16.mxu0 %v1812
    %2303 = vmatpush1.bf16.msra.mxu0 %v1811
    %2304 = vmatprep.subr.bf16.mxu0 %v1817
    %2305 = vmatpush1.bf16.msra.mxu0 %v1816
    %2306 = vmatprep.subr.bf16.mxu0 %v1822
    %2307 = vmatpush1.bf16.msra.mxu0 %v1821
    %2308 = vmatprep.subr.bf16.mxu0 %v1827
    %2309 = vmatpush1.bf16.msra.mxu0 %v1826
    %2310 = vmatprep.subr.bf16.mxu0 %v1832
    %2311 = vmatpush1.bf16.msra.mxu0 %v1831
    %2312 = vmatprep.subr.bf16.mxu0 %v1837
    %2313 = vmatpush1.bf16.msra.mxu0 %v1836
    %2314 = vmatprep.mubr.bf16.mxu0 %v418
    %2315 = vmatmul.mubr.bf16.gmra.mrb[0].mxu0 %v417
    %v2316 = vpop.f32.mrb[0].mxu0
    %v2317 = vadd.f32 %v2276, %v2316
    %v2318 = vpop.f32.mrb[0].mxu0
    %v2319 = vadd.f32 %v2278, %v2318
    %v2320 = vpop.f32.mrb[0].mxu0
    %v2321 = vpop.f32.mrb[0].mxu0
    %2322 = vdwg.mxu0
    %2323 = vmatprep.subr.bf16.mxu0 %v1842
    %2324 = vmatpush1.bf16.msra.mxu0 %v1841
    %2325 = vmatprep.subr.bf16.mxu0 %v1847
    %2326 = vmatpush1.bf16.msra.mxu0 %v1846
    %2327 = vmatprep.subr.bf16.mxu0 %v1852
    %2328 = vmatpush1.bf16.msra.mxu0 %v1851
    %2329 = vmatprep.subr.bf16.mxu0 %v1857
    %2330 = vmatpush1.bf16.msra.mxu0 %v1856
    %2331 = vmatprep.subr.bf16.mxu0 %v1862
    %2332 = vmatpush1.bf16.msra.mxu0 %v1861
    %2333 = vmatprep.subr.bf16.mxu0 %v1867
    %2334 = vmatpush1.bf16.msra.mxu0 %v1866
    %2335 = vmatprep.subr.bf16.mxu0 %v1872
    %2336 = vmatpush1.bf16.msra.mxu0 %v1871
    %2337 = vmatprep.subr.bf16.mxu0 %v1877
    %2338 = vmatpush1.bf16.msra.mxu0 %v1876
    %2339 = vmatprep.subr.bf16.mxu0 %v1882
    %2340 = vmatpush1.bf16.msra.mxu0 %v1881
    %2341 = vmatprep.subr.bf16.mxu0 %v1887
    %2342 = vmatpush1.bf16.msra.mxu0 %v1886
    %2343 = vmatprep.subr.bf16.mxu0 %v1892
    %2344 = vmatpush1.bf16.msra.mxu0 %v1891
    %2345 = vmatprep.subr.bf16.mxu0 %v1897
    %2346 = vmatpush1.bf16.msra.mxu0 %v1896
    %2347 = vmatprep.subr.bf16.mxu0 %v1902
    %2348 = vmatpush1.bf16.msra.mxu0 %v1901
    %2349 = vmatprep.subr.bf16.mxu0 %v1907
    %2350 = vmatpush1.bf16.msra.mxu0 %v1906
    %2351 = vmatprep.subr.bf16.mxu0 %v1912
    %2352 = vmatpush1.bf16.msra.mxu0 %v1911
    %2353 = vmatprep.subr.bf16.mxu0 %v1917
    %2354 = vmatpush1.bf16.msra.mxu0 %v1916
    %2355 = vmatprep.mubr.bf16.mxu0 %v420
    %2356 = vmatmul.mubr.bf16.gmra.mrb[0].mxu0 %v419
    %v2357 = vpop.f32.mrb[0].mxu0
    %v2358 = vadd.f32 %v2317, %v2357
    %v2359 = vpop.f32.mrb[0].mxu0
    %v2360 = vadd.f32 %v2319, %v2359
    %v2361 = vpop.f32.mrb[0].mxu0
    %v2362 = vpop.f32.mrb[0].mxu0
    %2363 = vdwg.mxu0
    %2364 = vmatprep.subr.bf16.mxu0 %v1922
    %2365 = vmatpush1.bf16.msra.mxu0 %v1921
    %2366 = vmatprep.subr.bf16.mxu0 %v1927
    %2367 = vmatpush1.bf16.msra.mxu0 %v1926
    %2368 = vmatprep.subr.bf16.mxu0 %v1932
    %2369 = vmatpush1.bf16.msra.mxu0 %v1931
    %2370 = vmatprep.subr.bf16.mxu0 %v1937
    %2371 = vmatpush1.bf16.msra.mxu0 %v1936
    %2372 = vmatprep.subr.bf16.mxu0 %v1942
    %2373 = vmatpush1.bf16.msra.mxu0 %v1941
    %2374 = vmatprep.subr.bf16.mxu0 %v1947
    %2375 = vmatpush1.bf16.msra.mxu0 %v1946
    %2376 = vmatprep.subr.bf16.mxu0 %v1952
    %2377 = vmatpush1.bf16.msra.mxu0 %v1951
    %2378 = vmatprep.subr.bf16.mxu0 %v1957
    %2379 = vmatpush1.bf16.msra.mxu0 %v1956
    %2380 = vmatprep.subr.bf16.mxu0 0
    %2381 = vmatpush1.bf16.msra.mxu0 0
    %2382 = vmatprep.subr.bf16.mxu0 0
    %2383 = vmatpush1.bf16.msra.mxu0 0
    %2384 = vmatprep.subr.bf16.mxu0 0
    %2385 = vmatpush1.bf16.msra.mxu0 0
    %2386 = vmatprep.subr.bf16.mxu0 0
    %2387 = vmatpush1.bf16.msra.mxu0 0
    %2388 = vmatprep.subr.bf16.mxu0 0
    %2389 = vmatpush1.bf16.msra.mxu0 0
    %2390 = vmatprep.subr.bf16.mxu0 0
    %2391 = vmatpush1.bf16.msra.mxu0 0
    %2392 = vmatprep.subr.bf16.mxu0 0
    %2393 = vmatpush1.bf16.msra.mxu0 0
    %2394 = vmatprep.subr.bf16.mxu0 0
    %2395 = vmatpush1.bf16.msra.mxu0 0
    %2396 = vmatprep.mubr.bf16.mxu0 0
    %2397 = vmatmul.mubr.bf16.gmra.mrb[0].mxu0 %v421
    %v2398 = vpop.f32.mrb[0].mxu0
    %v2399 = vadd.f32 %v2358, %v2398
    %v2400 = vpop.f32.mrb[0].mxu0
    %v2401 = vadd.f32 %v2360, %v2400
    %v2402 = vpop.f32.mrb[0].mxu0
    %v2403 = vpop.f32.mrb[0].mxu0
    %2404 = vdwg.mxu0
    %2405 = vmatprep.subr.bf16.mxu0 %v1684
    %2406 = vmatpush1.bf16.msra.mxu0 %v1683
    %2407 = vmatprep.subr.bf16.mxu0 %v1689
    %2408 = vmatpush1.bf16.msra.mxu0 %v1688
    %2409 = vmatprep.subr.bf16.mxu0 %v1694
    %2410 = vmatpush1.bf16.msra.mxu0 %v1693
    %2411 = vmatprep.subr.bf16.mxu0 %v1699
    %2412 = vmatpush1.bf16.msra.mxu0 %v1698
    %2413 = vmatprep.subr.bf16.mxu0 %v1704
    %2414 = vmatpush1.bf16.msra.mxu0 %v1703
    %2415 = vmatprep.subr.bf16.mxu0 %v1709
    %2416 = vmatpush1.bf16.msra.mxu0 %v1708
    %2417 = vmatprep.subr.bf16.mxu0 %v1714
    %2418 = vmatpush1.bf16.msra.mxu0 %v1713
    %2419 = vmatprep.subr.bf16.mxu0 %v1719
    %2420 = vmatpush1.bf16.msra.mxu0 %v1718
    %2421 = vmatprep.subr.bf16.mxu0 %v1724
    %2422 = vmatpush1.bf16.msra.mxu0 %v1723
    %2423 = vmatprep.subr.bf16.mxu0 %v1729
    %2424 = vmatpush1.bf16.msra.mxu0 %v1728
    %2425 = vmatprep.subr.bf16.mxu0 %v1734
    %2426 = vmatpush1.bf16.msra.mxu0 %v1733
    %2427 = vmatprep.subr.bf16.mxu0 %v1739
    %2428 = vmatpush1.bf16.msra.mxu0 %v1738
    %2429 = vmatprep.subr.bf16.mxu0 %v1744
    %2430 = vmatpush1.bf16.msra.mxu0 %v1743
    %2431 = vmatprep.subr.bf16.mxu0 %v1749
    %2432 = vmatpush1.bf16.msra.mxu0 %v1748
    %2433 = vmatprep.subr.bf16.mxu0 %v1754
    %2434 = vmatpush1.bf16.msra.mxu0 %v1753
    %2435 = vmatprep.subr.bf16.mxu0 %v1759
    %2436 = vmatpush1.bf16.msra.mxu0 %v1758
    %2437 = vmatprep.mubr.bf16.mxu0 %v416
    %2438 = vmatmul.mubr.bf16.gmra.mrb[0].mxu0 %v415
    %v2439 = vpop.f32.mrb[0].mxu0
    %v2440 = vadd.f32 %v771, %v2439
    %v2441 = vpop.f32.mrb[0].mxu0
    %v2442 = vadd.f32 %v775, %v2441
    %v2443 = vpop.f32.mrb[0].mxu0
    %v2444 = vpop.f32.mrb[0].mxu0
    %2445 = vdwg.mxu0
    %2446 = vmatprep.subr.bf16.mxu0 %v1764
    %2447 = vmatpush1.bf16.msra.mxu0 %v1763
    %2448 = vmatprep.subr.bf16.mxu0 %v1769
    %2449 = vmatpush1.bf16.msra.mxu0 %v1768
    %2450 = vmatprep.subr.bf16.mxu0 %v1774
    %2451 = vmatpush1.bf16.msra.mxu0 %v1773
    %2452 = vmatprep.subr.bf16.mxu0 %v1779
    %2453 = vmatpush1.bf16.msra.mxu0 %v1778
    %2454 = vmatprep.subr.bf16.mxu0 %v1784
    %2455 = vmatpush1.bf16.msra.mxu0 %v1783
    %2456 = vmatprep.subr.bf16.mxu0 %v1789
    %2457 = vmatpush1.bf16.msra.mxu0 %v1788
    %2458 = vmatprep.subr.bf16.mxu0 %v1794
    %2459 = vmatpush1.bf16.msra.mxu0 %v1793
    %2460 = vmatprep.subr.bf16.mxu0 %v1799
    %2461 = vmatpush1.bf16.msra.mxu0 %v1798
    %2462 = vmatprep.subr.bf16.mxu0 %v1804
    %2463 = vmatpush1.bf16.msra.mxu0 %v1803
    %2464 = vmatprep.subr.bf16.mxu0 %v1809
    %2465 = vmatpush1.bf16.msra.mxu0 %v1808
    %2466 = vmatprep.subr.bf16.mxu0 %v1814
    %2467 = vmatpush1.bf16.msra.mxu0 %v1813
    %2468 = vmatprep.subr.bf16.mxu0 %v1819
    %2469 = vmatpush1.bf16.msra.mxu0 %v1818
    %2470 = vmatprep.subr.bf16.mxu0 %v1824
    %2471 = vmatpush1.bf16.msra.mxu0 %v1823
    %2472 = vmatprep.subr.bf16.mxu0 %v1829
    %2473 = vmatpush1.bf16.msra.mxu0 %v1828
    %2474 = vmatprep.subr.bf16.mxu0 %v1834
    %2475 = vmatpush1.bf16.msra.mxu0 %v1833
    %2476 = vmatprep.subr.bf16.mxu0 %v1839
    %2477 = vmatpush1.bf16.msra.mxu0 %v1838
    %2478 = vmatprep.mubr.bf16.mxu0 %v418
    %2479 = vmatmul.mubr.bf16.gmra.mrb[0].mxu0 %v417
    %v2480 = vpop.f32.mrb[0].mxu0
    %v2481 = vadd.f32 %v2440, %v2480
    %v2482 = vpop.f32.mrb[0].mxu0
    %v2483 = vadd.f32 %v2442, %v2482
    %v2484 = vpop.f32.mrb[0].mxu0
    %v2485 = vpop.f32.mrb[0].mxu0
    %2486 = vdwg.mxu0
    %2487 = vmatprep.subr.bf16.mxu0 %v1844
    %2488 = vmatpush1.bf16.msra.mxu0 %v1843
    %2489 = vmatprep.subr.bf16.mxu0 %v1849
    %2490 = vmatpush1.bf16.msra.mxu0 %v1848
    %2491 = vmatprep.subr.bf16.mxu0 %v1854
    %2492 = vmatpush1.bf16.msra.mxu0 %v1853
    %2493 = vmatprep.subr.bf16.mxu0 %v1859
    %2494 = vmatpush1.bf16.msra.mxu0 %v1858
    %2495 = vmatprep.subr.bf16.mxu0 %v1864
    %2496 = vmatpush1.bf16.msra.mxu0 %v1863
    %2497 = vmatprep.subr.bf16.mxu0 %v1869
    %2498 = vmatpush1.bf16.msra.mxu0 %v1868
    %2499 = vmatprep.subr.bf16.mxu0 %v1874
    %2500 = vmatpush1.bf16.msra.mxu0 %v1873
    %2501 = vmatprep.subr.bf16.mxu0 %v1879
    %2502 = vmatpush1.bf16.msra.mxu0 %v1878
    %2503 = vmatprep.subr.bf16.mxu0 %v1884
    %2504 = vmatpush1.bf16.msra.mxu0 %v1883
    %2505 = vmatprep.subr.bf16.mxu0 %v1889
    %2506 = vmatpush1.bf16.msra.mxu0 %v1888
    %2507 = vmatprep.subr.bf16.mxu0 %v1894
    %2508 = vmatpush1.bf16.msra.mxu0 %v1893
    %2509 = vmatprep.subr.bf16.mxu0 %v1899
    %2510 = vmatpush1.bf16.msra.mxu0 %v1898
    %2511 = vmatprep.subr.bf16.mxu0 %v1904
    %2512 = vmatpush1.bf16.msra.mxu0 %v1903
    %2513 = vmatprep.subr.bf16.mxu0 %v1909
    %2514 = vmatpush1.bf16.msra.mxu0 %v1908
    %2515 = vmatprep.subr.bf16.mxu0 %v1914
    %2516 = vmatpush1.bf16.msra.mxu0 %v1913
    %2517 = vmatprep.subr.bf16.mxu0 %v1919
    %2518 = vmatpush1.bf16.msra.mxu0 %v1918
    %2519 = vmatprep.mubr.bf16.mxu0 %v420
    %2520 = vmatmul.mubr.bf16.gmra.mrb[0].mxu0 %v419
    %v2521 = vpop.f32.mrb[0].mxu0
    %v2522 = vadd.f32 %v2481, %v2521
    %v2523 = vpop.f32.mrb[0].mxu0
    %v2524 = vadd.f32 %v2483, %v2523
    %v2525 = vpop.f32.mrb[0].mxu0
    %v2526 = vpop.f32.mrb[0].mxu0
    %2527 = vdwg.mxu0
    %2528 = vmatprep.subr.bf16.mxu0 %v1924
    %2529 = vmatpush1.bf16.msra.mxu0 %v1923
    %2530 = vmatprep.subr.bf16.mxu0 %v1929
    %2531 = vmatpush1.bf16.msra.mxu0 %v1928
    %2532 = vmatprep.subr.bf16.mxu0 %v1934
    %2533 = vmatpush1.bf16.msra.mxu0 %v1933
    %2534 = vmatprep.subr.bf16.mxu0 %v1939
    %2535 = vmatpush1.bf16.msra.mxu0 %v1938
    %2536 = vmatprep.subr.bf16.mxu0 %v1944
    %2537 = vmatpush1.bf16.msra.mxu0 %v1943
    %2538 = vmatprep.subr.bf16.mxu0 %v1949
    %2539 = vmatpush1.bf16.msra.mxu0 %v1948
    %2540 = vmatprep.subr.bf16.mxu0 %v1954
    %2541 = vmatpush1.bf16.msra.mxu0 %v1953
    %2542 = vmatprep.subr.bf16.mxu0 %v1959
    %2543 = vmatpush1.bf16.msra.mxu0 %v1958
    %2544 = vmatprep.subr.bf16.mxu0 0
    %2545 = vmatpush1.bf16.msra.mxu0 0
    %2546 = vmatprep.subr.bf16.mxu0 0
    %2547 = vmatpush1.bf16.msra.mxu0 0
    %2548 = vmatprep.subr.bf16.mxu0 0
    %2549 = vmatpush1.bf16.msra.mxu0 0
    %2550 = vmatprep.subr.bf16.mxu0 0
    %2551 = vmatpush1.bf16.msra.mxu0 0
    %2552 = vmatprep.subr.bf16.mxu0 0
    %2553 = vmatpush1.bf16.msra.mxu0 0
    %2554 = vmatprep.subr.bf16.mxu0 0
    %2555 = vmatpush1.bf16.msra.mxu0 0
    %2556 = vmatprep.subr.bf16.mxu0 0
    %2557 = vmatpush1.bf16.msra.mxu0 0
    %2558 = vmatprep.subr.bf16.mxu0 0
    %2559 = vmatpush1.bf16.msra.mxu0 0
    %2560 = vmatprep.mubr.bf16.mxu0 0
    %2561 = vmatmul.mubr.bf16.gmra.mrb[0].mxu0 %v421
    %v2562 = vpop.f32.mrb[0].mxu0
    %v2563 = vadd.f32 %v2522, %v2562
    %v2564 = vpop.f32.mrb[0].mxu0
    %v2565 = vadd.f32 %v2524, %v2564
    %v2566 = vpop.f32.mrb[0].mxu0
    %v2567 = vpop.f32.mrb[0].mxu0
    %2568 = vdwg.mxu0
    %2569 = vmatprep.subr.bf16.mxu0 0
    %2570 = vmatpush1.bf16.msra.mxu0 %v1685
    %2571 = vmatprep.subr.bf16.mxu0 0
    %2572 = vmatpush1.bf16.msra.mxu0 %v1690
    %2573 = vmatprep.subr.bf16.mxu0 0
    %2574 = vmatpush1.bf16.msra.mxu0 %v1695
    %2575 = vmatprep.subr.bf16.mxu0 0
    %2576 = vmatpush1.bf16.msra.mxu0 %v1700
    %2577 = vmatprep.subr.bf16.mxu0 0
    %2578 = vmatpush1.bf16.msra.mxu0 %v1705
    %2579 = vmatprep.subr.bf16.mxu0 0
    %2580 = vmatpush1.bf16.msra.mxu0 %v1710
    %2581 = vmatprep.subr.bf16.mxu0 0
    %2582 = vmatpush1.bf16.msra.mxu0 %v1715
    %2583 = vmatprep.subr.bf16.mxu0 0
    %2584 = vmatpush1.bf16.msra.mxu0 %v1720
    %2585 = vmatprep.subr.bf16.mxu0 0
    %2586 = vmatpush1.bf16.msra.mxu0 %v1725
    %2587 = vmatprep.subr.bf16.mxu0 0
    %2588 = vmatpush1.bf16.msra.mxu0 %v1730
    %2589 = vmatprep.subr.bf16.mxu0 0
    %2590 = vmatpush1.bf16.msra.mxu0 %v1735
    %2591 = vmatprep.subr.bf16.mxu0 0
    %2592 = vmatpush1.bf16.msra.mxu0 %v1740
    %2593 = vmatprep.subr.bf16.mxu0 0
    %2594 = vmatpush1.bf16.msra.mxu0 %v1745
    %2595 = vmatprep.subr.bf16.mxu0 0
    %2596 = vmatpush1.bf16.msra.mxu0 %v1750
    %2597 = vmatprep.subr.bf16.mxu0 0
    %2598 = vmatpush1.bf16.msra.mxu0 %v1755
    %2599 = vmatprep.subr.bf16.mxu0 0
    %2600 = vmatpush1.bf16.msra.mxu0 %v1760
    %2601 = vmatprep.mubr.bf16.mxu0 %v416
    %2602 = vmatmul.mubr.bf16.gmra.mrb[0].mxu0 %v415
    %v2603 = vpop.f32.mrb[0].mxu0
    %v2604 = vadd.f32 %v779, %v2603
    %v2605 = vpop.f32.mrb[0].mxu0
    %v2606 = vpop.f32.mrb[0].mxu0
    %v2607 = vpop.f32.mrb[0].mxu0
    %2608 = vdwg.mxu0
    %2609 = vmatprep.subr.bf16.mxu0 0
    %2610 = vmatpush1.bf16.msra.mxu0 %v1765
    %2611 = vmatprep.subr.bf16.mxu0 0
    %2612 = vmatpush1.bf16.msra.mxu0 %v1770
    %2613 = vmatprep.subr.bf16.mxu0 0
    %2614 = vmatpush1.bf16.msra.mxu0 %v1775
    %2615 = vmatprep.subr.bf16.mxu0 0
    %2616 = vmatpush1.bf16.msra.mxu0 %v1780
    %2617 = vmatprep.subr.bf16.mxu0 0
    %2618 = vmatpush1.bf16.msra.mxu0 %v1785
    %2619 = vmatprep.subr.bf16.mxu0 0
    %2620 = vmatpush1.bf16.msra.mxu0 %v1790
    %2621 = vmatprep.subr.bf16.mxu0 0
    %2622 = vmatpush1.bf16.msra.mxu0 %v1795
    %2623 = vmatprep.subr.bf16.mxu0 0
    %2624 = vmatpush1.bf16.msra.mxu0 %v1800
    %2625 = vmatprep.subr.bf16.mxu0 0
    %2626 = vmatpush1.bf16.msra.mxu0 %v1805
    %2627 = vmatprep.subr.bf16.mxu0 0
    %2628 = vmatpush1.bf16.msra.mxu0 %v1810
    %2629 = vmatprep.subr.bf16.mxu0 0
    %2630 = vmatpush1.bf16.msra.mxu0 %v1815
    %2631 = vmatprep.subr.bf16.mxu0 0
    %2632 = vmatpush1.bf16.msra.mxu0 %v1820
    %2633 = vmatprep.subr.bf16.mxu0 0
    %2634 = vmatpush1.bf16.msra.mxu0 %v1825
    %2635 = vmatprep.subr.bf16.mxu0 0
    %2636 = vmatpush1.bf16.msra.mxu0 %v1830
    %2637 = vmatprep.subr.bf16.mxu0 0
    %2638 = vmatpush1.bf16.msra.mxu0 %v1835
    %2639 = vmatprep.subr.bf16.mxu0 0
    %2640 = vmatpush1.bf16.msra.mxu0 %v1840
    %2641 = vmatprep.mubr.bf16.mxu0 %v418
    %2642 = vmatmul.mubr.bf16.gmra.mrb[0].mxu0 %v417
    %v2643 = vpop.f32.mrb[0].mxu0
    %v2644 = vadd.f32 %v2604, %v2643
    %v2645 = vpop.f32.mrb[0].mxu0
    %v2646 = vpop.f32.mrb[0].mxu0
    %v2647 = vpop.f32.mrb[0].mxu0
    %2648 = vdwg.mxu0
    %2649 = vmatprep.subr.bf16.mxu0 0
    %2650 = vmatpush1.bf16.msra.mxu0 %v1845
    %2651 = vmatprep.subr.bf16.mxu0 0
    %2652 = vmatpush1.bf16.msra.mxu0 %v1850
    %2653 = vmatprep.subr.bf16.mxu0 0
    %2654 = vmatpush1.bf16.msra.mxu0 %v1855
    %2655 = vmatprep.subr.bf16.mxu0 0
    %2656 = vmatpush1.bf16.msra.mxu0 %v1860
    %2657 = vmatprep.subr.bf16.mxu0 0
    %2658 = vmatpush1.bf16.msra.mxu0 %v1865
    %2659 = vmatprep.subr.bf16.mxu0 0
    %2660 = vmatpush1.bf16.msra.mxu0 %v1870
    %2661 = vmatprep.subr.bf16.mxu0 0
    %2662 = vmatpush1.bf16.msra.mxu0 %v1875
    %2663 = vmatprep.subr.bf16.mxu0 0
    %2664 = vmatpush1.bf16.msra.mxu0 %v1880
    %2665 = vmatprep.subr.bf16.mxu0 0
    %2666 = vmatpush1.bf16.msra.mxu0 %v1885
    %2667 = vmatprep.subr.bf16.mxu0 0
    %2668 = vmatpush1.bf16.msra.mxu0 %v1890
    %2669 = vmatprep.subr.bf16.mxu0 0
    %2670 = vmatpush1.bf16.msra.mxu0 %v1895
    %2671 = vmatprep.subr.bf16.mxu0 0
    %2672 = vmatpush1.bf16.msra.mxu0 %v1900
    %2673 = vmatprep.subr.bf16.mxu0 0
    %2674 = vmatpush1.bf16.msra.mxu0 %v1905
    %2675 = vmatprep.subr.bf16.mxu0 0
    %2676 = vmatpush1.bf16.msra.mxu0 %v1910
    %2677 = vmatprep.subr.bf16.mxu0 0
    %2678 = vmatpush1.bf16.msra.mxu0 %v1915
    %2679 = vmatprep.subr.bf16.mxu0 0
    %2680 = vmatpush1.bf16.msra.mxu0 %v1920
    %2681 = vmatprep.mubr.bf16.mxu0 %v420
    %2682 = vmatmul.mubr.bf16.gmra.mrb[0].mxu0 %v419
    %v2683 = vpop.f32.mrb[0].mxu0
    %v2684 = vadd.f32 %v2644, %v2683
    %v2685 = vpop.f32.mrb[0].mxu0
    %v2686 = vpop.f32.mrb[0].mxu0
    %v2687 = vpop.f32.mrb[0].mxu0
    %2688 = vdwg.mxu0
    %2689 = vmatprep.subr.bf16.mxu0 0
    %2690 = vmatpush1.bf16.msra.mxu0 %v1925
    %2691 = vmatprep.subr.bf16.mxu0 0
    %2692 = vmatpush1.bf16.msra.mxu0 %v1930
    %2693 = vmatprep.subr.bf16.mxu0 0
    %2694 = vmatpush1.bf16.msra.mxu0 %v1935
    %2695 = vmatprep.subr.bf16.mxu0 0
    %2696 = vmatpush1.bf16.msra.mxu0 %v1940
    %2697 = vmatprep.subr.bf16.mxu0 0
    %2698 = vmatpush1.bf16.msra.mxu0 %v1945
    %2699 = vmatprep.subr.bf16.mxu0 0
    %2700 = vmatpush1.bf16.msra.mxu0 %v1950
    %2701 = vmatprep.subr.bf16.mxu0 0
    %2702 = vmatpush1.bf16.msra.mxu0 %v1955
    %2703 = vmatprep.subr.bf16.mxu0 0
    %2704 = vmatpush1.bf16.msra.mxu0 %v1960
    %2705 = vmatprep.subr.bf16.mxu0 0
    %2706 = vmatpush1.bf16.msra.mxu0 0
    %2707 = vmatprep.subr.bf16.mxu0 0
    %2708 = vmatpush1.bf16.msra.mxu0 0
    %2709 = vmatprep.subr.bf16.mxu0 0
    %2710 = vmatpush1.bf16.msra.mxu0 0
    %2711 = vmatprep.subr.bf16.mxu0 0
    %2712 = vmatpush1.bf16.msra.mxu0 0
    %2713 = vmatprep.subr.bf16.mxu0 0
    %2714 = vmatpush1.bf16.msra.mxu0 0
    %2715 = vmatprep.subr.bf16.mxu0 0
    %2716 = vmatpush1.bf16.msra.mxu0 0
    %2717 = vmatprep.subr.bf16.mxu0 0
    %2718 = vmatpush1.bf16.msra.mxu0 0
    %2719 = vmatprep.subr.bf16.mxu0 0
    %2720 = vmatpush1.bf16.msra.mxu0 0
    %2721 = vmatprep.mubr.bf16.mxu0 0
    %2722 = vmatmul.mubr.bf16.gmra.mrb[0].mxu0 %v421
    %v2723 = vpop.f32.mrb[0].mxu0
    %v2724 = vadd.f32 %v2684, %v2723
    %v2725 = vpop.f32.mrb[0].mxu0
    %v2726 = vpop.f32.mrb[0].mxu0
    %v2727 = vpop.f32.mrb[0].mxu0
    %2728 = vdwg.mxu0
    %v2729 = vmax.f32 %v2399, 0.0
    %v2730 = vmax.f32 %v2401, 0.0
    %v2731 = vmax.f32 %v2563, 0.0
    %v2732 = vmax.f32 %v2565, 0.0
    %v2733 = vmax.f32 %v2724, 0.0
    %v2734 = vpack.c.bf16 %v2729, %v2729
    %v2735 = vpack.c.bf16 %v2730, %v2730
    %v2736 = vpack.c.bf16 %v2731, %v2731
    %v2737 = vpack.c.bf16 %v2732, %v2732
    %v2738 = vpack.c.bf16 %v2733, %v2733
    %v2739 = vld [vmem:[#allocation11] sm:$0xf]
    %v2740 = vld [vmem:[#allocation11 + $0x4] sm:$0xf]
    %v2741 = vld [vmem:[#allocation11 + $0x8] sm:$0xf]
    %v2742 = vld [vmem:[#allocation11 + $0xc] sm:$0xf]
    %v2743 = vld [vmem:[#allocation11 + $0x10] sm:$0xf]
    %v2744 = vld [vmem:[#allocation11 + $0x14] sm:$0xf]
    %v2745 = vld [vmem:[#allocation11 + $0x18] sm:$0xf]
    %v2746 = vld [vmem:[#allocation11 + $0x1c] sm:$0xf]
    %v2747 = vld [vmem:[#allocation11 + $0x20] sm:$0xf]
    %v2748 = vld [vmem:[#allocation11 + $0x24] sm:$0xf]
    %v2749 = vld [vmem:[#allocation11 + $0x28] sm:$0xf]
    %v2750 = vld [vmem:[#allocation11 + $0x2c] sm:$0xf]
    %v2751 = vld [vmem:[#allocation11 + $0x30] sm:$0xf]
    %v2752 = vld [vmem:[#allocation11 + $0x34] sm:$0xf]
    %v2753 = vld [vmem:[#allocation11 + $0x38] sm:$0xf]
    %v2754 = vld [vmem:[#allocation11 + $0x3c] sm:$0xf]
    %v2755 = vld [vmem:[#allocation11 + $0x40] sm:$0xf]
    %v2756 = vld [vmem:[#allocation11 + $0x44] sm:$0xf]
    %v2757 = vld [vmem:[#allocation11 + $0x48] sm:$0xf]
    %v2758 = vld [vmem:[#allocation11 + $0x4c] sm:$0xf]
    %v2759 = vld [vmem:[#allocation11 + $0x50] sm:$0xf]
    %v2760 = vld [vmem:[#allocation11 + $0x54] sm:$0xf]
    %v2761 = vld [vmem:[#allocation11 + $0x58] sm:$0xf]
    %v2762 = vld [vmem:[#allocation11 + $0x5c] sm:$0xf]
    %v2763 = vld [vmem:[#allocation11 + $0x60] sm:$0xf]
    %v2764 = vld [vmem:[#allocation11 + $0x64] sm:$0xf]
    %v2765 = vld [vmem:[#allocation11 + $0x68] sm:$0xf]
    %v2766 = vld [vmem:[#allocation11 + $0x6c] sm:$0xf]
    %v2767 = vld [vmem:[#allocation11 + $0x70] sm:$0xf]
    %v2768 = vld [vmem:[#allocation11 + $0x74] sm:$0xf]
    %v2769 = vld [vmem:[#allocation11 + $0x78] sm:$0xf]
    %v2770 = vld [vmem:[#allocation11 + $0x7c] sm:$0xf]
    %v2771 = vld [vmem:[#allocation11 + $0x80] sm:$0xf]
    %v2772 = vld [vmem:[#allocation11 + $0x84] sm:$0xf]
    %v2773 = vld [vmem:[#allocation11 + $0x88] sm:$0xf]
    %v2774 = vld [vmem:[#allocation11 + $0x8c] sm:$0xf]
    %v2775 = vld [vmem:[#allocation11 + $0x90] sm:$0xf]
    %v2776 = vld [vmem:[#allocation11 + $0x94] sm:$0xf]
    %v2777 = vld [vmem:[#allocation11 + $0x98] sm:$0xf]
    %v2778 = vld [vmem:[#allocation11 + $0x9c] sm:$0xf]
    %v2779 = vld [vmem:[#allocation11 + $0xa0] sm:$0xf]
    %v2780 = vld [vmem:[#allocation11 + $0xa4] sm:$0xf]
    %v2781 = vld [vmem:[#allocation11 + $0xa8] sm:$0xf]
    %v2782 = vld [vmem:[#allocation11 + $0xac] sm:$0xf]
    %v2783 = vld [vmem:[#allocation11 + $0xb0] sm:$0xf]
    %v2784 = vld [vmem:[#allocation11 + $0xb4] sm:$0xf]
    %v2785 = vld [vmem:[#allocation11 + $0xb8] sm:$0xf]
    %v2786 = vld [vmem:[#allocation11 + $0xbc] sm:$0xf]
    %v2787 = vld [vmem:[#allocation11 + $0xc0] sm:$0xf]
    %v2788 = vld [vmem:[#allocation11 + $0xc4] sm:$0xf]
    %v2789 = vld [vmem:[#allocation11 + $0xc8] sm:$0xf]
    %v2790 = vld [vmem:[#allocation11 + $0xcc] sm:$0xf]
    %v2791 = vld [vmem:[#allocation11 + $0xd0] sm:$0xf]
    %v2792 = vld [vmem:[#allocation11 + $0xd4] sm:$0xf]
    %v2793 = vld [vmem:[#allocation11 + $0xd8] sm:$0xf]
    %v2794 = vld [vmem:[#allocation11 + $0xdc] sm:$0xf]
    %v2795 = vld [vmem:[#allocation11 + $0xe0] sm:$0xf]
    %v2796 = vld [vmem:[#allocation11 + $0xe4] sm:$0xf]
    %v2797 = vld [vmem:[#allocation11 + $0xe8] sm:$0xf]
    %v2798 = vld [vmem:[#allocation11 + $0xec] sm:$0xf]
    %v2799 = vld [vmem:[#allocation11 + $0xf0] sm:$0xf]
    %v2800 = vld [vmem:[#allocation11 + $0xf4] sm:$0xf]
    %v2801 = vld [vmem:[#allocation11 + $0xf8] sm:$0xf]
    %v2802 = vld [vmem:[#allocation11 + $0xfc] sm:$0xf]
    %v2803 = vld [vmem:[#allocation11 + $0x100] sm:$0xf]
    %v2804 = vld [vmem:[#allocation11 + $0x104] sm:$0xf]
    %v2805 = vld [vmem:[#allocation11 + $0x108] sm:$0xf]
    %v2806 = vld [vmem:[#allocation11 + $0x10c] sm:$0xf]
    %v2807 = vld [vmem:[#allocation11 + $0x110] sm:$0xf]
    %v2808 = vld [vmem:[#allocation11 + $0x114] sm:$0xf]
    %v2809 = vld [vmem:[#allocation11 + $0x118] sm:$0xf]
    %v2810 = vld [vmem:[#allocation11 + $0x11c] sm:$0xf]
    %v2811 = vld [vmem:[#allocation11 + $0x120] sm:$0xf]
    %v2812 = vld [vmem:[#allocation11 + $0x124] sm:$0xf]
    %v2813 = vld [vmem:[#allocation11 + $0x128] sm:$0xf]
    %v2814 = vld [vmem:[#allocation11 + $0x12c] sm:$0xf]
    %v2815 = vld [vmem:[#allocation11 + $0x130] sm:$0xf]
    %v2816 = vld [vmem:[#allocation11 + $0x134] sm:$0xf]
    %v2817 = vld [vmem:[#allocation11 + $0x138] sm:$0xf]
    %v2818 = vld [vmem:[#allocation11 + $0x13c] sm:$0xf]
    %v2819 = vld [vmem:[#allocation13] sm:$0x1]
    %v2821 = vlaneseq
    %v2822 = vshrl.u32 %v2821, 7
    %v2823 = vsub.s32 0, %v2822
    %v2824 = vrot.slane %v2819, %v2823
    %v2906 = vunpack.c.l.b16 %v2739
    %v2907 = vunpack.c.l.b16 %v2740
    %v2908 = vunpack.c.l.b16 %v2741
    %v2909 = vunpack.c.l.b16 %v2742
    %v2910 = vunpack.c.l.b16 %v2743
    %v2911 = vunpack.c.l.b16 %v2744
    %v2912 = vunpack.c.l.b16 %v2745
    %v2913 = vunpack.c.l.b16 %v2746
    %v2914 = vunpack.c.l.b16 %v2747
    %v2915 = vunpack.c.l.b16 %v2748
    %v2916 = vunpack.c.l.b16 %v2749
    %v2917 = vunpack.c.l.b16 %v2750
    %v2918 = vunpack.c.l.b16 %v2751
    %v2919 = vunpack.c.l.b16 %v2752
    %v2920 = vunpack.c.l.b16 %v2753
    %v2921 = vunpack.c.l.b16 %v2754
    %v2922 = vunpack.c.l.b16 %v2755
    %v2923 = vunpack.c.l.b16 %v2756
    %v2924 = vunpack.c.l.b16 %v2757
    %v2925 = vunpack.c.l.b16 %v2758
    %v2926 = vunpack.c.l.b16 %v2759
    %v2927 = vunpack.c.l.b16 %v2760
    %v2928 = vunpack.c.l.b16 %v2761
    %v2929 = vunpack.c.l.b16 %v2762
    %v2930 = vunpack.c.l.b16 %v2763
    %v2931 = vunpack.c.l.b16 %v2764
    %v2932 = vunpack.c.l.b16 %v2765
    %v2933 = vunpack.c.l.b16 %v2766
    %v2934 = vunpack.c.l.b16 %v2767
    %v2935 = vunpack.c.l.b16 %v2768
    %v2936 = vunpack.c.l.b16 %v2769
    %v2937 = vunpack.c.l.b16 %v2770
    %v2938 = vunpack.c.l.b16 %v2771
    %v2939 = vunpack.c.l.b16 %v2772
    %v2940 = vunpack.c.l.b16 %v2773
    %v2941 = vunpack.c.l.b16 %v2774
    %v2942 = vunpack.c.l.b16 %v2775
    %v2943 = vunpack.c.l.b16 %v2776
    %v2944 = vunpack.c.l.b16 %v2777
    %v2945 = vunpack.c.l.b16 %v2778
    %v2946 = vunpack.c.l.b16 %v2779
    %v2947 = vunpack.c.l.b16 %v2780
    %v2948 = vunpack.c.l.b16 %v2781
    %v2949 = vunpack.c.l.b16 %v2782
    %v2950 = vunpack.c.l.b16 %v2783
    %v2951 = vunpack.c.l.b16 %v2784
    %v2952 = vunpack.c.l.b16 %v2785
    %v2953 = vunpack.c.l.b16 %v2786
    %v2954 = vunpack.c.l.b16 %v2787
    %v2955 = vunpack.c.l.b16 %v2788
    %v2956 = vunpack.c.l.b16 %v2789
    %v2957 = vunpack.c.l.b16 %v2790
    %v2958 = vunpack.c.l.b16 %v2791
    %v2959 = vunpack.c.l.b16 %v2792
    %v2960 = vunpack.c.l.b16 %v2793
    %v2961 = vunpack.c.l.b16 %v2794
    %v2962 = vunpack.c.l.b16 %v2795
    %v2963 = vunpack.c.l.b16 %v2796
    %v2964 = vunpack.c.l.b16 %v2797
    %v2965 = vunpack.c.l.b16 %v2798
    %v2966 = vunpack.c.l.b16 %v2799
    %v2967 = vunpack.c.l.b16 %v2800
    %v2968 = vunpack.c.l.b16 %v2801
    %v2969 = vunpack.c.l.b16 %v2802
    %v2970 = vunpack.c.l.b16 %v2803
    %v2971 = vunpack.c.l.b16 %v2804
    %v2972 = vunpack.c.l.b16 %v2805
    %v2973 = vunpack.c.l.b16 %v2806
    %v2974 = vunpack.c.l.b16 %v2807
    %v2975 = vunpack.c.l.b16 %v2808
    %v2976 = vunpack.c.l.b16 %v2809
    %v2977 = vunpack.c.l.b16 %v2810
    %v2978 = vunpack.c.l.b16 %v2811
    %v2979 = vunpack.c.l.b16 %v2812
    %v2980 = vunpack.c.l.b16 %v2813
    %v2981 = vunpack.c.l.b16 %v2814
    %v2982 = vunpack.c.l.b16 %v2815
    %v2983 = vunpack.c.l.b16 %v2816
    %v2984 = vunpack.c.l.b16 %v2817
    %v2985 = vunpack.c.l.b16 %v2818
    %v2986 = vpack.c.b16 %v2907, %v2906
    %v2987 = vpack.c.b16 %v2909, %v2908
    %v2988 = vpack.c.b16 %v2911, %v2910
    %v2989 = vpack.c.b16 %v2913, %v2912
    %v2990 = vpack.c.b16 %v2915, %v2914
    %v2991 = vpack.c.b16 %v2917, %v2916
    %v2992 = vpack.c.b16 %v2919, %v2918
    %v2993 = vpack.c.b16 %v2921, %v2920
    %v2994 = vpack.c.b16 %v2923, %v2922
    %v2995 = vpack.c.b16 %v2925, %v2924
    %v2996 = vpack.c.b16 %v2927, %v2926
    %v2997 = vpack.c.b16 %v2929, %v2928
    %v2998 = vpack.c.b16 %v2931, %v2930
    %v2999 = vpack.c.b16 %v2933, %v2932
    %v3000 = vpack.c.b16 %v2935, %v2934
    %v3001 = vpack.c.b16 %v2937, %v2936
    %v3002 = vpack.c.b16 %v2939, %v2938
    %v3003 = vpack.c.b16 %v2941, %v2940
    %v3004 = vpack.c.b16 %v2943, %v2942
    %v3005 = vpack.c.b16 %v2945, %v2944
    %v3006 = vpack.c.b16 %v2947, %v2946
    %v3007 = vpack.c.b16 %v2949, %v2948
    %v3008 = vpack.c.b16 %v2951, %v2950
    %v3009 = vpack.c.b16 %v2953, %v2952
    %v3010 = vpack.c.b16 %v2955, %v2954
    %v3011 = vpack.c.b16 %v2957, %v2956
    %v3012 = vpack.c.b16 %v2959, %v2958
    %v3013 = vpack.c.b16 %v2961, %v2960
    %v3014 = vpack.c.b16 %v2963, %v2962
    %v3015 = vpack.c.b16 %v2965, %v2964
    %v3016 = vpack.c.b16 %v2967, %v2966
    %v3017 = vpack.c.b16 %v2969, %v2968
    %v3018 = vpack.c.b16 %v2971, %v2970
    %v3019 = vpack.c.b16 %v2973, %v2972
    %v3020 = vpack.c.b16 %v2975, %v2974
    %v3021 = vpack.c.b16 %v2977, %v2976
    %v3022 = vpack.c.b16 %v2979, %v2978
    %v3023 = vpack.c.b16 %v2981, %v2980
    %v3024 = vpack.c.b16 %v2983, %v2982
    %v3025 = vpack.c.b16 %v2985, %v2984
    %3066 = vmatprep.subr.bf16.mxu0 0
    %3067 = vmatpush1.bf16.msra.mxu0 %v2986
    %3068 = vmatprep.subr.bf16.mxu0 0
    %3069 = vmatpush1.bf16.msra.mxu0 %v2987
    %3070 = vmatprep.subr.bf16.mxu0 0
    %3071 = vmatpush1.bf16.msra.mxu0 %v2988
    %3072 = vmatprep.subr.bf16.mxu0 0
    %3073 = vmatpush1.bf16.msra.mxu0 %v2989
    %3074 = vmatprep.subr.bf16.mxu0 0
    %3075 = vmatpush1.bf16.msra.mxu0 %v2990
    %3076 = vmatprep.subr.bf16.mxu0 0
    %3077 = vmatpush1.bf16.msra.mxu0 %v2991
    %3078 = vmatprep.subr.bf16.mxu0 0
    %3079 = vmatpush1.bf16.msra.mxu0 %v2992
    %3080 = vmatprep.subr.bf16.mxu0 0
    %3081 = vmatpush1.bf16.msra.mxu0 %v2993
    %3082 = vmatprep.subr.bf16.mxu0 0
    %3083 = vmatpush1.bf16.msra.mxu0 %v2994
    %3084 = vmatprep.subr.bf16.mxu0 0
    %3085 = vmatpush1.bf16.msra.mxu0 %v2995
    %3086 = vmatprep.subr.bf16.mxu0 0
    %3087 = vmatpush1.bf16.msra.mxu0 %v2996
    %3088 = vmatprep.subr.bf16.mxu0 0
    %3089 = vmatpush1.bf16.msra.mxu0 %v2997
    %3090 = vmatprep.subr.bf16.mxu0 0
    %3091 = vmatpush1.bf16.msra.mxu0 %v2998
    %3092 = vmatprep.subr.bf16.mxu0 0
    %3093 = vmatpush1.bf16.msra.mxu0 %v2999
    %3094 = vmatprep.subr.bf16.mxu0 0
    %3095 = vmatpush1.bf16.msra.mxu0 %v3000
    %3096 = vmatprep.subr.bf16.mxu0 0
    %3097 = vmatpush1.bf16.msra.mxu0 %v3001
    %3098 = vmatprep.mubr.bf16.mxu0 %v2735
    %3099 = vmatmul.mubr.bf16.gmra.mrb[0].mxu0 %v2734
    %v3100 = vpop.f32.mrb[0].mxu0
    %v3101 = vadd.f32 %v2824, %v3100
    %v3102 = vpop.f32.mrb[0].mxu0
    %v3103 = vpop.f32.mrb[0].mxu0
    %v3104 = vpop.f32.mrb[0].mxu0
    %3105 = vdwg.mxu0
    %3106 = vmatprep.subr.bf16.mxu0 0
    %3107 = vmatpush1.bf16.msra.mxu0 %v3002
    %3108 = vmatprep.subr.bf16.mxu0 0
    %3109 = vmatpush1.bf16.msra.mxu0 %v3003
    %3110 = vmatprep.subr.bf16.mxu0 0
    %3111 = vmatpush1.bf16.msra.mxu0 %v3004
    %3112 = vmatprep.subr.bf16.mxu0 0
    %3113 = vmatpush1.bf16.msra.mxu0 %v3005
    %3114 = vmatprep.subr.bf16.mxu0 0
    %3115 = vmatpush1.bf16.msra.mxu0 %v3006
    %3116 = vmatprep.subr.bf16.mxu0 0
    %3117 = vmatpush1.bf16.msra.mxu0 %v3007
    %3118 = vmatprep.subr.bf16.mxu0 0
    %3119 = vmatpush1.bf16.msra.mxu0 %v3008
    %3120 = vmatprep.subr.bf16.mxu0 0
    %3121 = vmatpush1.bf16.msra.mxu0 %v3009
    %3122 = vmatprep.subr.bf16.mxu0 0
    %3123 = vmatpush1.bf16.msra.mxu0 %v3010
    %3124 = vmatprep.subr.bf16.mxu0 0
    %3125 = vmatpush1.bf16.msra.mxu0 %v3011
    %3126 = vmatprep.subr.bf16.mxu0 0
    %3127 = vmatpush1.bf16.msra.mxu0 %v3012
    %3128 = vmatprep.subr.bf16.mxu0 0
    %3129 = vmatpush1.bf16.msra.mxu0 %v3013
    %3130 = vmatprep.subr.bf16.mxu0 0
    %3131 = vmatpush1.bf16.msra.mxu0 %v3014
    %3132 = vmatprep.subr.bf16.mxu0 0
    %3133 = vmatpush1.bf16.msra.mxu0 %v3015
    %3134 = vmatprep.subr.bf16.mxu0 0
    %3135 = vmatpush1.bf16.msra.mxu0 %v3016
    %3136 = vmatprep.subr.bf16.mxu0 0
    %3137 = vmatpush1.bf16.msra.mxu0 %v3017
    %3138 = vmatprep.mubr.bf16.mxu0 %v2737
    %3139 = vmatmul.mubr.bf16.gmra.mrb[0].mxu0 %v2736
    %v3140 = vpop.f32.mrb[0].mxu0
    %v3141 = vadd.f32 %v3101, %v3140
    %v3142 = vpop.f32.mrb[0].mxu0
    %v3143 = vpop.f32.mrb[0].mxu0
    %v3144 = vpop.f32.mrb[0].mxu0
    %3145 = vdwg.mxu0
    %3146 = vmatprep.subr.bf16.mxu0 0
    %3147 = vmatpush1.bf16.msra.mxu0 %v3018
    %3148 = vmatprep.subr.bf16.mxu0 0
    %3149 = vmatpush1.bf16.msra.mxu0 %v3019
    %3150 = vmatprep.subr.bf16.mxu0 0
    %3151 = vmatpush1.bf16.msra.mxu0 %v3020
    %3152 = vmatprep.subr.bf16.mxu0 0
    %3153 = vmatpush1.bf16.msra.mxu0 %v3021
    %3154 = vmatprep.subr.bf16.mxu0 0
    %3155 = vmatpush1.bf16.msra.mxu0 %v3022
    %3156 = vmatprep.subr.bf16.mxu0 0
    %3157 = vmatpush1.bf16.msra.mxu0 %v3023
    %3158 = vmatprep.subr.bf16.mxu0 0
    %3159 = vmatpush1.bf16.msra.mxu0 %v3024
    %3160 = vmatprep.subr.bf16.mxu0 0
    %3161 = vmatpush1.bf16.msra.mxu0 %v3025
    %3162 = vmatprep.subr.bf16.mxu0 0
    %3163 = vmatpush1.bf16.msra.mxu0 0
    %3164 = vmatprep.subr.bf16.mxu0 0
    %3165 = vmatpush1.bf16.msra.mxu0 0
    %3166 = vmatprep.subr.bf16.mxu0 0
    %3167 = vmatpush1.bf16.msra.mxu0 0
    %3168 = vmatprep.subr.bf16.mxu0 0
    %3169 = vmatpush1.bf16.msra.mxu0 0
    %3170 = vmatprep.subr.bf16.mxu0 0
    %3171 = vmatpush1.bf16.msra.mxu0 0
    %3172 = vmatprep.subr.bf16.mxu0 0
    %3173 = vmatpush1.bf16.msra.mxu0 0
    %3174 = vmatprep.subr.bf16.mxu0 0
    %3175 = vmatpush1.bf16.msra.mxu0 0
    %3176 = vmatprep.subr.bf16.mxu0 0
    %3177 = vmatpush1.bf16.msra.mxu0 0
    %3178 = vmatprep.mubr.bf16.mxu0 0
    %3179 = vmatmul.mubr.bf16.gmra.mrb[0].mxu0 %v2738
    %v3180 = vpop.f32.mrb[0].mxu0
    %v3181 = vadd.f32 %v3141, %v3180
    %v3182 = vpop.f32.mrb[0].mxu0
    %v3183 = vpop.f32.mrb[0].mxu0
    %v3184 = vpop.f32.mrb[0].mxu0
    %3185 = vdwg.mxu0
    %v3186 = vtanh.pop %v3181
    %3187 = vst [vmem:[#allocation14] sm:$0xff] %v3186
    // Predicated region
    $region58: #{tpu_custom_call.1} parent=1 // pred_check
      _
    $region59: #{tpu_custom_call.1} parent=1 // pred_check_branch
      %3189 = sbr.rel (0) target = $region61
    $region60: #{tpu_custom_call.1} parent=1 // pred_region
      %s3191 = ssub.s32 128, 128
      %3192 = vsyncadd [#allocation4], %s3191
      %s3194 = sshll.u32 [#allocation14], 4
      %s3195 = int_to_ptr.vmem [resolvable:$true] %s3194
      %3197 = dma.vmem_to_hbm [thread:$0]  %s3195, 128, %s7, [#allocation4]
    $region61: #{tpu_custom_call.1} parent=1 // pred_fallthru
      _
    // Predicated region
    $region62: #{tpu_custom_call.1} parent=1 // pred_check
      _
    $region63: #{tpu_custom_call.1} parent=1 // pred_check_branch
      %3199 = sbr.rel (0) target = $region65
    $region64: #{tpu_custom_call.1} parent=1 // pred_region
      %3200 = dma.done [#allocation4], 128
    $region65: #{tpu_custom_call.1} parent=1 // pred_fallthru
      _
    %3201 = vsyncpa [#allocation3], 1
    %3202 = vsyncpa [#allocation6], 1
    %3203 = vsyncpa [#allocation9], 1
    %3204 = vsyncpa [#allocation12], 1
    %3205 = vsyncpa [#allocation4], 1

</llo_original>
